<compile_context>
chip_gen: v5e
topology: v5e:2x2
jax: 0.10.0
libtpu: 0.0.40
codegen_flags: <defaults>
</compile_context>

<pallas_src>
import numpy as np

import jax
import jax.numpy as jnp
from jax import lax
from jax.experimental import pallas as pl
from jax.experimental.pallas import tpu as pltpu


def _vmem():
    return pl.BlockSpec(memory_space=pltpu.MemorySpace.VMEM)


# ---------------------------------------------------------------------------
# Fused Upsampler kernel
# ---------------------------------------------------------------------------
def upsampler_kernel(left_ref, x_ref, u_ref, pe_ref, po_ref, ub_ref,
                     w2_ref, w1_ref, gm2_ref, bt2_ref, gm1_ref, bt1_ref,
                     ps_ref, pb_ref,
                     out_ref, lpad_ref, upad_ref):
    N, Ho, L = left_ref.shape            # L = Wo * S  (lane-dense row width)
    R = N * Ho
    S = gm2_ref.shape[-1]
    M = R * (L // S)                     # per-channel element count = N*Ho*Wo
    f32, bf16 = jnp.float32, jnp.bfloat16

    # ---- ConvTranspose2d(k=2, s=2): one lane-dense matmul.  U's columns are ordered
    #      (row-parity di | output col | cout) so each 128-lane half of a row of `y`
    #      is a finished upsampled row; PE/PO (0/1 selectors) scatter the halves to
    #      even/odd rows on the otherwise-idle MXU (no aux scratch, no strided store).
    y = jnp.dot(x_ref[...].astype(bf16), u_ref[...],
                preferred_element_type=f32).astype(bf16)            # (N*H, 2L)
    up = (jnp.dot(pe_ref[...], y[:, :L], preferred_element_type=f32)
          + jnp.dot(po_ref[...], y[:, L:], preferred_element_type=f32)
          + ub_ref[...])                                            # (R, L) f32

    # ---- bf16 padded buffers: zero only the 1-row halo (W padding lives in the
    #      banded conv weights, so there is no W halo and no whole-buffer zeroing).
    zrow = jnp.zeros((N, L), bf16)
    lpad_ref[:, 0, :] = zrow
    lpad_ref[:, Ho + 1, :] = zrow
    upad_ref[:, 0, :] = zrow
    upad_ref[:, Ho + 1, :] = zrow
    lpad_ref[:, 1:Ho + 1, :] = left_ref[...].astype(bf16)
    upad_ref[:, 1:Ho + 1, :] = up.reshape(N, Ho, L).astype(bf16)

    def slabs(pad_ref):
        # Three row-shifted full-lane-width views; kw shifts + W padding are folded
        # into the block-banded weights, so no narrow lane slices / 9-tap concat.
        return [pad_ref[:, kh:kh + Ho, :].reshape(R, L) for kh in range(3)]

    def bn_relu(acc, gm_ref, bt_ref):
        # Training-mode BatchNorm2d (biased batch stats), single reduction pass.
        # PS folds lanes -> channels, PB broadcasts channels -> lanes (tiny matmuls
        # instead of sub-128-lane reshapes).
        sums = jnp.concatenate([jnp.sum(acc, axis=0, keepdims=True),
                                jnp.sum(acc * acc, axis=0, keepdims=True)], axis=0)
        chan = jnp.dot(sums, ps_ref[...], preferred_element_type=f32) * (1.0 / M)
        mean, ex2 = chan[0:1, :], chan[1:2, :]
        var = jnp.maximum(ex2 - mean * mean, 0.0)   # guard E[x^2]-E[x]^2 cancellation
        scale_c = gm_ref[...] * lax.rsqrt(var + 1e-5)
        shift_c = bt_ref[...] - mean * scale_c
        ss = jnp.dot(jnp.concatenate([scale_c, shift_c], axis=0), pb_ref[...],
                     preferred_element_type=f32)                    # (2, L)
        return jnp.maximum(acc * ss[0:1, :] + ss[1:2, :], 0.0)

    # ---- Block 2: Conv3x3(2S -> S) over cat([left, up]) as ONE K = 6*L matmul -----
    op2 = jnp.concatenate(slabs(lpad_ref) + slabs(upad_ref), axis=-1)   # (R, 6L) bf16
    h = bn_relu(jnp.dot(op2, w2_ref[...], preferred_element_type=f32), gm2_ref, bt2_ref)

    # ---- Block 1: Conv3x3(S -> S); lpad is dead, reuse it as the padded hidden ----
    lpad_ref[:, 1:Ho + 1, :] = h.reshape(N, Ho, L).astype(bf16)
    op1 = jnp.concatenate(slabs(lpad_ref), axis=-1)                     # (R, 3L) bf16
    acc1 = jnp.dot(op1, w1_ref[...], preferred_element_type=f32)
    out_ref[...] = bn_relu(acc1, gm1_ref, bt1_ref).astype(out_ref.dtype)


# ---------------------------------------------------------------------------
# Wrapper (lane-dense in/out reshapes are layout no-ops in row-major HBM)
# ---------------------------------------------------------------------------
@jax.jit
def upsampler_forward(left, x, ops):
    """left: (N, 2H, 2W, S) f32; x: (N, H, W, Cin) f32.  Returns (N, 2H, 2W, S) f32."""
    N, Ho, Wo, S = left.shape
    _, H, W, Cin = x.shape
    L = Wo * S
    R = N * Ho

    left2d = left.reshape(N, Ho, L)       # fold (W, C) into the lane dim
    x2d = x.reshape(N * H, W * Cin)

    flops = (2 * (N * H) * (W * Cin) * (2 * L)       # transposed conv
             + 2 * 2 * R * (N * H) * L               # parity scatter matmuls
             + 2 * R * (6 * L) * L                   # conv2 (left+up fused)
             + 2 * R * (3 * L) * L                   # conv1
             + 12 * R * L)                           # BN / ReLU epilogues
    param_bytes = sum(int(v.size) * int(v.dtype.itemsize) for v in ops.values())
    cost = pl.CostEstimate(flops=int(flops), transcendentals=2 * S,
                           bytes_accessed=int(4 * (left.size + x.size + R * L)
                                              + param_bytes))

    out2d = pl.pallas_call(
        upsampler_kernel,
        out_shape=jax.ShapeDtypeStruct((R, L), jnp.float32),   # lane-dense output slab
        in_specs=[_vmem()] * 14,
        out_specs=_vmem(),
        scratch_shapes=[
            pltpu.VMEM((N, Ho + 2, L), jnp.bfloat16),   # padded `left`, reused for hidden h
            pltpu.VMEM((N, Ho + 2, L), jnp.bfloat16),   # padded upsampled activations
        ],
        # Far above the ~1 MiB actually needed, below physical VMEM on all generations.
        compiler_params=pltpu.CompilerParams(vmem_limit_bytes=32 * 1024 * 1024),
        cost_estimate=cost,
    )(left2d, x2d, ops["U"], ops["PE"], ops["PO"], ops["ub"],
      ops["W2"], ops["W1"], ops["g2"], ops["bt2"], ops["g1"], ops["bt1"],
      ops["PS"], ops["PB"])
    return out2d.reshape(N, Ho, Wo, S)


# ---------------------------------------------------------------------------
# Parameters (natural layout) and one-time pre-packing into lane-dense operands
# ---------------------------------------------------------------------------
def init_params(key, inlen, size):
    ks = jax.random.split(key, 10)
    s_up = 1.0 / np.sqrt(inlen * 4.0)
    s2 = 1.0 / np.sqrt(2 * size * 9.0)
    s1 = 1.0 / np.sqrt(size * 9.0)
    return {
        # ConvTranspose2d(inlen, size, 2, 2): weight[ci, di, dj, s] (torch stores (ci, s, di, dj))
        "up_w": jax.random.normal(ks[0], (inlen, 2, 2, size), jnp.float32) * s_up,
        "up_b": jax.random.normal(ks[1], (size,), jnp.float32) * s_up,
        # Block(2*size, size): HWIO, cin = [left channels | upsampled channels]
        "w2": jax.random.normal(ks[2], (3, 3, 2 * size, size), jnp.float32) * s2,
        "b2": jax.random.normal(ks[3], (size,), jnp.float32) * s2,
        "g2": 1.0 + 0.1 * jax.random.normal(ks[4], (size,), jnp.float32),
        "bt2": 0.1 * jax.random.normal(ks[5], (size,), jnp.float32),
        # Block(size, size)
        "w1": jax.random.normal(ks[6], (3, 3, size, size), jnp.float32) * s1,
        "b1": jax.random.normal(ks[7], (size,), jnp.float32) * s1,
        "g1": 1.0 + 0.1 * jax.random.normal(ks[8], (size,), jnp.float32),
        "bt1": 0.1 * jax.random.normal(ks[9], (size,), jnp.float32),
    }


def prepare_operands(params, N, H, W):
    """One-time pre-pack of natural-layout weights into the kernel's lane-dense forms."""
    up_w = np.asarray(params["up_w"], np.float32)   # (Cin, 2, 2, S)
    up_b = np.asarray(params["up_b"], np.float32)   # (S,)
    w2 = np.asarray(params["w2"], np.float32)       # (3, 3, 2S, S), cin = [left | up]
    w1 = np.asarray(params["w1"], np.float32)       # (3, 3, S, S)
    Cin, _, _, S = up_w.shape
    Ho, Wo = 2 * H, 2 * W
    L = Wo * S

    # Transposed conv as block-diagonal matmul: columns ordered (parity di | col | cout).
    U = np.zeros((W * Cin, 2 * L), np.float32)
    for j in range(W):
        for di in range(2):
            for dj in range(2):
                c0 = di * L + (2 * j + dj) * S
                U[j * Cin:(j + 1) * Cin, c0:c0 + S] = up_w[:, di, dj, :]
    ub = np.tile(up_b, Wo).reshape(1, L)

    # 0/1 row-scatter matrices: input row q=(n,i) -> output rows 2q (even) / 2q+1 (odd).
    NH, R = N * H, N * Ho
    PE = np.zeros((R, NH), np.float32)
    PO = np.zeros((R, NH), np.float32)
    q = np.arange(NH)
    PE[2 * q, q] = 1.0
    PO[2 * q + 1, q] = 1.0

    def banded(w):
        # (3, 3, Ci, Co) -> (3*Wo*Ci, Wo*Co): block-banded matrix encoding the kw
        # shifts + zero W-padding, stacked over kh to match 3 row-shifted slabs.
        _, _, Ci, Co = w.shape
        bw = np.zeros((3, Wo * Ci, Wo * Co), np.float32)
        for kh in range(3):
            for kw in range(3):
                for c_out in range(Wo):
                    c_in = c_out + kw - 1
                    if 0 <= c_in < Wo:
                        bw[kh, c_in * Ci:(c_in + 1) * Ci,
                           c_out * Co:(c_out + 1) * Co] = w[kh, kw]
        return bw.reshape(3 * Wo * Ci, Wo * Co)

    W2 = np.concatenate([banded(w2[:, :, :S, :]), banded(w2[:, :, S:, :])], axis=0)
    W1 = banded(w1)

    # Lane<->channel selectors for per-channel BatchNorm stats in lane-dense layout.
    PS = np.zeros((L, S), np.float32)
    for c in range(Wo):
        PS[c * S:(c + 1) * S, :] = np.eye(S, dtype=np.float32)
    PB = PS.T.copy()

    # NOTE: conv biases b1/b2 are intentionally not packed - they cancel exactly under
    # training-mode batch-statistics BatchNorm (constant per-channel shift before BN).
    bf16 = jnp.bfloat16
    return {
        "U": jnp.asarray(U, bf16), "PE": jnp.asarray(PE, bf16), "PO": jnp.asarray(PO, bf16),
        "ub": jnp.asarray(ub, jnp.float32),
        "W2": jnp.asarray(W2, bf16), "W1": jnp.asarray(W1, bf16),
        "g2": jnp.asarray(params["g2"], jnp.float32).reshape(1, S),
        "bt2": jnp.asarray(params["bt2"], jnp.float32).reshape(1, S),
        "g1": jnp.asarray(params["g1"], jnp.float32).reshape(1, S),
        "bt1": jnp.asarray(params["bt1"], jnp.float32).reshape(1, S),
        "PS": jnp.asarray(PS, jnp.float32), "PB": jnp.asarray(PB, jnp.float32),
    }


# ---------------------------------------------------------------------------
# Pure-JAX reference (training-mode BN, includes the conv biases)
# ---------------------------------------------------------------------------
def upsampler_reference(left, x, p):
    N, H, W, Cin = x.shape
    S = p["up_w"].shape[-1]
    hi = lax.Precision.HIGHEST
    up = jnp.einsum('nijc,cdes->nidjes', x, p["up_w"],
                    precision=hi).reshape(N, 2 * H, 2 * W, S) + p["up_b"]
    z = jnp.concatenate([left, up], axis=-1)

    def block(z, w, b, g, beta):
        z = lax.conv_general_dilated(z, w, (1, 1), 'SAME',
                                     dimension_numbers=('NHWC', 'HWIO', 'NHWC'),
                                     precision=hi) + b
        mean = jnp.mean(z, axis=(0, 1, 2), keepdims=True)
        var = jnp.mean(jnp.square(z - mean), axis=(0, 1, 2), keepdims=True)
        return jnp.maximum((z - mean) * lax.rsqrt(var + 1e-5) * g + beta, 0.0)

    h = block(z, p["w2"], p["b2"], p["g2"], p["bt2"])
    return block(h, p["w1"], p["b1"], p["g1"], p["bt1"])


if __name__ == "__main__":
    inlen, size = 8, 4
    N, H, W = 2, 16, 16            # output spatial = (32, 32); Wo*size = 128 -> dense lanes

    key = jax.random.PRNGKey(0)
    k_left, k_x, k_p = jax.random.split(key, 3)

    x = jax.random.normal(k_x, (N, H, W, inlen), jnp.float32)            # NHWC of torch (2, 8, 16, 16)
    left = jax.random.normal(k_left, (N, 2 * H, 2 * W, size), jnp.float32)
    params = init_params(k_p, inlen, size)
    ops = prepare_operands(params, N, H, W)

    out = jax.block_until_ready(upsampler_forward(left, x, ops))
    assert out.shape == (N, 2 * H, 2 * W, size)
    assert bool(jnp.all(jnp.isfinite(out)))

    # Numerical sanity check vs. f32 reference (kernel matmuls are bf16 -> loose tol).
    ref = upsampler_reference(left, x, params)
    rel_l2 = float(jnp.sqrt(jnp.sum((out - ref) ** 2) / (jnp.sum(ref ** 2) + 1e-12)))
    assert rel_l2 < 0.05, f"relative L2 error too large: {rel_l2}"

    print("KERNEL_OK")
</pallas_src>

<mosaic_0001>
module attributes {stable_mosaic.version = 11 : i64} {
  func.func @upsampler_kernel(%arg0: memref<2x32x128xf32, #tpu.memory_space<vmem>>, %arg1: memref<32x128xf32, #tpu.memory_space<vmem>>, %arg2: memref<128x256xbf16, #tpu.memory_space<vmem>>, %arg3: memref<64x32xbf16, #tpu.memory_space<vmem>>, %arg4: memref<64x32xbf16, #tpu.memory_space<vmem>>, %arg5: memref<1x128xf32, #tpu.memory_space<vmem>>, %arg6: memref<768x128xbf16, #tpu.memory_space<vmem>>, %arg7: memref<384x128xbf16, #tpu.memory_space<vmem>>, %arg8: memref<1x4xf32, #tpu.memory_space<vmem>>, %arg9: memref<1x4xf32, #tpu.memory_space<vmem>>, %arg10: memref<1x4xf32, #tpu.memory_space<vmem>>, %arg11: memref<1x4xf32, #tpu.memory_space<vmem>>, %arg12: memref<128x4xf32, #tpu.memory_space<vmem>>, %arg13: memref<4x128xf32, #tpu.memory_space<vmem>>, %arg14: memref<64x128xf32, #tpu.memory_space<vmem>>, %arg15: memref<2x34x128xbf16, #tpu.memory_space<vmem>>, %arg16: memref<2x34x128xbf16, #tpu.memory_space<vmem>>) attributes {dimension_semantics = [], scalar_prefetch = 0 : i64, scratch_operands = 2 : i64, tpu.core_type = #tpu.core_type<tc>} {
    %c0 = arith.constant 0 : index
    %c0_0 = arith.constant 0 : index
    %0 = vector.load %arg1[%c0, %c0_0] : memref<32x128xf32, #tpu.memory_space<vmem>>, vector<32x128xf32>
    %1 = arith.truncf %0 : vector<32x128xf32> to vector<32x128xbf16>
    %c0_1 = arith.constant 0 : index
    %c0_2 = arith.constant 0 : index
    %2 = vector.load %arg2[%c0_1, %c0_2] : memref<128x256xbf16, #tpu.memory_space<vmem>>, vector<128x256xbf16>
    %cst = arith.constant dense<0.000000e+00> : vector<32x256xf32>
    %3 = tpu.matmul %1, %2, %cst {dimension_numbers = #tpu.dot_dimension_numbers<[1], [0], [0], [1], [0, 0, 1, 1], [], []>} : vector<32x128xbf16>, vector<128x256xbf16>, vector<32x256xf32> -> vector<32x256xf32>
    %4 = arith.truncf %3 : vector<32x256xf32> to vector<32x256xbf16>
    %c0_3 = arith.constant 0 : index
    %c0_4 = arith.constant 0 : index
    %5 = vector.load %arg3[%c0_3, %c0_4] : memref<64x32xbf16, #tpu.memory_space<vmem>>, vector<64x32xbf16>
    %6 = vector.extract_strided_slice %4 {offsets = [0, 0], sizes = [32, 128], strides = [1, 1]} : vector<32x256xbf16> to vector<32x128xbf16>
    %cst_5 = arith.constant dense<0.000000e+00> : vector<64x128xf32>
    %7 = tpu.matmul %5, %6, %cst_5 {dimension_numbers = #tpu.dot_dimension_numbers<[1], [0], [0], [1], [0, 0, 1, 1], [], []>} : vector<64x32xbf16>, vector<32x128xbf16>, vector<64x128xf32> -> vector<64x128xf32>
    %c0_6 = arith.constant 0 : index
    %c0_7 = arith.constant 0 : index
    %8 = vector.load %arg4[%c0_6, %c0_7] : memref<64x32xbf16, #tpu.memory_space<vmem>>, vector<64x32xbf16>
    %9 = vector.extract_strided_slice %4 {offsets = [0, 128], sizes = [32, 128], strides = [1, 1]} : vector<32x256xbf16> to vector<32x128xbf16>
    %cst_8 = arith.constant dense<0.000000e+00> : vector<64x128xf32>
    %10 = tpu.matmul %8, %9, %cst_8 {dimension_numbers = #tpu.dot_dimension_numbers<[1], [0], [0], [1], [0, 0, 1, 1], [], []>} : vector<64x32xbf16>, vector<32x128xbf16>, vector<64x128xf32> -> vector<64x128xf32>
    %11 = arith.addf %7, %10 : vector<64x128xf32>
    %c0_9 = arith.constant 0 : index
    %c0_10 = arith.constant 0 : index
    %12 = vector.load %arg5[%c0_9, %c0_10] : memref<1x128xf32, #tpu.memory_space<vmem>>, vector<1x128xf32>
    %13 = vector.broadcast %12 : vector<1x128xf32> to vector<64x128xf32>
    %14 = arith.addf %11, %13 : vector<64x128xf32>
    %cst_11 = arith.constant 0.000000e+00 : bf16
    %15 = vector.broadcast %cst_11 : bf16 to vector<2x128xbf16>
    %c0_12 = arith.constant 0 : index
    %c0_13 = arith.constant 0 : index
    %c0_14 = arith.constant 0 : index
    %16 = vector.load %arg15[%c0_12, %c0_13, %c0_14] : memref<2x34x128xbf16, #tpu.memory_space<vmem>>, vector<2x1x128xbf16>
    %17 = vector.shape_cast %16 : vector<2x1x128xbf16> to vector<2x128xbf16>
    %18 = vector.shape_cast %15 : vector<2x128xbf16> to vector<2x1x128xbf16>
    tpu.vector_store %arg15[%c0_12, %c0_13, %c0_14], %18 {strides = array<i32>} : memref<2x34x128xbf16, #tpu.memory_space<vmem>>, vector<2x1x128xbf16>,
    %c0_15 = arith.constant 0 : index
    %c33 = arith.constant 33 : index
    %c0_16 = arith.constant 0 : index
    %19 = vector.load %arg15[%c0_15, %c33, %c0_16] : memref<2x34x128xbf16, #tpu.memory_space<vmem>>, vector<2x1x128xbf16>
    %20 = vector.shape_cast %19 : vector<2x1x128xbf16> to vector<2x128xbf16>
    %21 = vector.shape_cast %15 : vector<2x128xbf16> to vector<2x1x128xbf16>
    tpu.vector_store %arg15[%c0_15, %c33, %c0_16], %21 {strides = array<i32>} : memref<2x34x128xbf16, #tpu.memory_space<vmem>>, vector<2x1x128xbf16>,
    %c0_17 = arith.constant 0 : index
    %c0_18 = arith.constant 0 : index
    %c0_19 = arith.constant 0 : index
    %22 = vector.load %arg16[%c0_17, %c0_18, %c0_19] : memref<2x34x128xbf16, #tpu.memory_space<vmem>>, vector<2x1x128xbf16>
    %23 = vector.shape_cast %22 : vector<2x1x128xbf16> to vector<2x128xbf16>
    %24 = vector.shape_cast %15 : vector<2x128xbf16> to vector<2x1x128xbf16>
    tpu.vector_store %arg16[%c0_17, %c0_18, %c0_19], %24 {strides = array<i32>} : memref<2x34x128xbf16, #tpu.memory_space<vmem>>, vector<2x1x128xbf16>,
    %c0_20 = arith.constant 0 : index
    %c33_21 = arith.constant 33 : index
    %c0_22 = arith.constant 0 : index
    %25 = vector.load %arg16[%c0_20, %c33_21, %c0_22] : memref<2x34x128xbf16, #tpu.memory_space<vmem>>, vector<2x1x128xbf16>
    %26 = vector.shape_cast %25 : vector<2x1x128xbf16> to vector<2x128xbf16>
    %27 = vector.shape_cast %15 : vector<2x128xbf16> to vector<2x1x128xbf16>
    tpu.vector_store %arg16[%c0_20, %c33_21, %c0_22], %27 {strides = array<i32>} : memref<2x34x128xbf16, #tpu.memory_space<vmem>>, vector<2x1x128xbf16>,
    %c0_23 = arith.constant 0 : index
    %c0_24 = arith.constant 0 : index
    %c0_25 = arith.constant 0 : index
    %28 = vector.load %arg0[%c0_23, %c0_24, %c0_25] : memref<2x32x128xf32, #tpu.memory_space<vmem>>, vector<2x32x128xf32>
    %29 = arith.truncf %28 : vector<2x32x128xf32> to vector<2x32x128xbf16>
    %c0_26 = arith.constant 0 : index
    %c1 = arith.constant 1 : index
    %c0_27 = arith.constant 0 : index
    %30 = vector.load %arg15[%c0_26, %c1, %c0_27] : memref<2x34x128xbf16, #tpu.memory_space<vmem>>, vector<2x32x128xbf16>
    tpu.vector_store %arg15[%c0_26, %c1, %c0_27], %29 {strides = array<i32>} : memref<2x34x128xbf16, #tpu.memory_space<vmem>>, vector<2x32x128xbf16>,
    %31 = vector.shape_cast %14 : vector<64x128xf32> to vector<2x32x128xf32>
    %32 = arith.truncf %31 : vector<2x32x128xf32> to vector<2x32x128xbf16>
    %c0_28 = arith.constant 0 : index
    %c1_29 = arith.constant 1 : index
    %c0_30 = arith.constant 0 : index
    %33 = vector.load %arg16[%c0_28, %c1_29, %c0_30] : memref<2x34x128xbf16, #tpu.memory_space<vmem>>, vector<2x32x128xbf16>
    tpu.vector_store %arg16[%c0_28, %c1_29, %c0_30], %32 {strides = array<i32>} : memref<2x34x128xbf16, #tpu.memory_space<vmem>>, vector<2x32x128xbf16>,
    %c0_31 = arith.constant 0 : index
    %c0_32 = arith.constant 0 : index
    %c0_33 = arith.constant 0 : index
    %34 = vector.load %arg15[%c0_31, %c0_32, %c0_33] : memref<2x34x128xbf16, #tpu.memory_space<vmem>>, vector<2x32x128xbf16>
    %35 = vector.shape_cast %34 : vector<2x32x128xbf16> to vector<64x128xbf16>
    %c0_34 = arith.constant 0 : index
    %c1_35 = arith.constant 1 : index
    %c0_36 = arith.constant 0 : index
    %36 = vector.load %arg15[%c0_34, %c1_35, %c0_36] : memref<2x34x128xbf16, #tpu.memory_space<vmem>>, vector<2x32x128xbf16>
    %37 = vector.shape_cast %36 : vector<2x32x128xbf16> to vector<64x128xbf16>
    %c0_37 = arith.constant 0 : index
    %c2 = arith.constant 2 : index
    %c0_38 = arith.constant 0 : index
    %38 = vector.load %arg15[%c0_37, %c2, %c0_38] : memref<2x34x128xbf16, #tpu.memory_space<vmem>>, vector<2x32x128xbf16>
    %39 = vector.shape_cast %38 : vector<2x32x128xbf16> to vector<64x128xbf16>
    %c0_39 = arith.constant 0 : index
    %c0_40 = arith.constant 0 : index
    %c0_41 = arith.constant 0 : index
    %40 = vector.load %arg16[%c0_39, %c0_40, %c0_41] : memref<2x34x128xbf16, #tpu.memory_space<vmem>>, vector<2x32x128xbf16>
    %41 = vector.shape_cast %40 : vector<2x32x128xbf16> to vector<64x128xbf16>
    %c0_42 = arith.constant 0 : index
    %c1_43 = arith.constant 1 : index
    %c0_44 = arith.constant 0 : index
    %42 = vector.load %arg16[%c0_42, %c1_43, %c0_44] : memref<2x34x128xbf16, #tpu.memory_space<vmem>>, vector<2x32x128xbf16>
    %43 = vector.shape_cast %42 : vector<2x32x128xbf16> to vector<64x128xbf16>
    %c0_45 = arith.constant 0 : index
    %c2_46 = arith.constant 2 : index
    %c0_47 = arith.constant 0 : index
    %44 = vector.load %arg16[%c0_45, %c2_46, %c0_47] : memref<2x34x128xbf16, #tpu.memory_space<vmem>>, vector<2x32x128xbf16>
    %45 = vector.shape_cast %44 : vector<2x32x128xbf16> to vector<64x128xbf16>
    %46 = tpu.concatenate %35, %37, %39, %41, %43, %45 in 1 : vector<64x128xbf16>, vector<64x128xbf16>, vector<64x128xbf16>, vector<64x128xbf16>, vector<64x128xbf16>, vector<64x128xbf16> -> vector<64x768xbf16>
    %c0_48 = arith.constant 0 : index
    %c0_49 = arith.constant 0 : index
    %47 = vector.load %arg6[%c0_48, %c0_49] : memref<768x128xbf16, #tpu.memory_space<vmem>>, vector<768x128xbf16>
    %cst_50 = arith.constant dense<0.000000e+00> : vector<64x128xf32>
    %48 = tpu.matmul %46, %47, %cst_50 {dimension_numbers = #tpu.dot_dimension_numbers<[1], [0], [0], [1], [0, 0, 1, 1], [], []>} : vector<64x768xbf16>, vector<768x128xbf16>, vector<64x128xf32> -> vector<64x128xf32>
    %cst_51 = arith.constant dense<0.000000e+00> : vector<128xf32>
    %49 = vector.multi_reduction <add>, %48, %cst_51 [0] : vector<64x128xf32> to vector<128xf32>
    %50 = vector.shape_cast %49 : vector<128xf32> to vector<1x128xf32>
    %51 = arith.mulf %48, %48 : vector<64x128xf32>
    %cst_52 = arith.constant dense<0.000000e+00> : vector<128xf32>
    %52 = vector.multi_reduction <add>, %51, %cst_52 [0] : vector<64x128xf32> to vector<128xf32>
    %53 = vector.shape_cast %52 : vector<128xf32> to vector<1x128xf32>
    %54 = tpu.concatenate %50, %53 in 0 : vector<1x128xf32>, vector<1x128xf32> -> vector<2x128xf32>
    %c0_53 = arith.constant 0 : index
    %c0_54 = arith.constant 0 : index
    %55 = vector.load %arg12[%c0_53, %c0_54] : memref<128x4xf32, #tpu.memory_space<vmem>>, vector<128x4xf32>
    %cst_55 = arith.constant dense<0.000000e+00> : vector<2x4xf32>
    %56 = tpu.matmul %54, %55, %cst_55 {dimension_numbers = #tpu.dot_dimension_numbers<[1], [0], [0], [1], [0, 0, 1, 1], [], []>} : vector<2x128xf32>, vector<128x4xf32>, vector<2x4xf32> -> vector<2x4xf32>
    %cst_56 = arith.constant 4.8828125E-4 : f32
    %57 = vector.broadcast %cst_56 : f32 to vector<2x4xf32>
    %58 = arith.mulf %56, %57 : vector<2x4xf32>
    %59 = vector.extract_strided_slice %58 {offsets = [0, 0], sizes = [1, 4], strides = [1, 1]} : vector<2x4xf32> to vector<1x4xf32>
    %60 = vector.extract_strided_slice %58 {offsets = [1, 0], sizes = [1, 4], strides = [1, 1]} : vector<2x4xf32> to vector<1x4xf32>
    %61 = arith.mulf %59, %59 : vector<1x4xf32>
    %62 = arith.subf %60, %61 : vector<1x4xf32>
    %cst_57 = arith.constant 0.000000e+00 : f32
    %63 = vector.broadcast %cst_57 : f32 to vector<1x4xf32>
    %64 = arith.maximumf %62, %63 : vector<1x4xf32>
    %c0_58 = arith.constant 0 : index
    %c0_59 = arith.constant 0 : index
    %65 = vector.load %arg8[%c0_58, %c0_59] : memref<1x4xf32, #tpu.memory_space<vmem>>, vector<1x4xf32>
    %cst_60 = arith.constant 9.99999974E-6 : f32
    %66 = vector.broadcast %cst_60 : f32 to vector<1x4xf32>
    %67 = arith.addf %64, %66 : vector<1x4xf32>
    %68 = math.rsqrt %67 : vector<1x4xf32>
    %69 = arith.mulf %65, %68 : vector<1x4xf32>
    %c0_61 = arith.constant 0 : index
    %c0_62 = arith.constant 0 : index
    %70 = vector.load %arg9[%c0_61, %c0_62] : memref<1x4xf32, #tpu.memory_space<vmem>>, vector<1x4xf32>
    %71 = arith.mulf %59, %69 : vector<1x4xf32>
    %72 = arith.subf %70, %71 : vector<1x4xf32>
    %73 = tpu.concatenate %69, %72 in 0 : vector<1x4xf32>, vector<1x4xf32> -> vector<2x4xf32>
    %c0_63 = arith.constant 0 : index
    %c0_64 = arith.constant 0 : index
    %74 = vector.load %arg13[%c0_63, %c0_64] : memref<4x128xf32, #tpu.memory_space<vmem>>, vector<4x128xf32>
    %cst_65 = arith.constant dense<0.000000e+00> : vector<2x128xf32>
    %75 = tpu.matmul %73, %74, %cst_65 {dimension_numbers = #tpu.dot_dimension_numbers<[1], [0], [0], [1], [0, 0, 1, 1], [], []>} : vector<2x4xf32>, vector<4x128xf32>, vector<2x128xf32> -> vector<2x128xf32>
    %76 = vector.extract_strided_slice %75 {offsets = [0, 0], sizes = [1, 128], strides = [1, 1]} : vector<2x128xf32> to vector<1x128xf32>
    %77 = vector.broadcast %76 : vector<1x128xf32> to vector<64x128xf32>
    %78 = arith.mulf %48, %77 : vector<64x128xf32>
    %79 = vector.extract_strided_slice %75 {offsets = [1, 0], sizes = [1, 128], strides = [1, 1]} : vector<2x128xf32> to vector<1x128xf32>
    %80 = vector.broadcast %79 : vector<1x128xf32> to vector<64x128xf32>
    %81 = arith.addf %78, %80 : vector<64x128xf32>
    %cst_66 = arith.constant 0.000000e+00 : f32
    %82 = vector.broadcast %cst_66 : f32 to vector<64x128xf32>
    %83 = arith.maximumf %81, %82 : vector<64x128xf32>
    %84 = vector.shape_cast %83 : vector<64x128xf32> to vector<2x32x128xf32>
    %85 = arith.truncf %84 : vector<2x32x128xf32> to vector<2x32x128xbf16>
    %c0_67 = arith.constant 0 : index
    %c1_68 = arith.constant 1 : index
    %c0_69 = arith.constant 0 : index
    %86 = vector.load %arg15[%c0_67, %c1_68, %c0_69] : memref<2x34x128xbf16, #tpu.memory_space<vmem>>, vector<2x32x128xbf16>
    tpu.vector_store %arg15[%c0_67, %c1_68, %c0_69], %85 {strides = array<i32>} : memref<2x34x128xbf16, #tpu.memory_space<vmem>>, vector<2x32x128xbf16>,
    %c0_70 = arith.constant 0 : index
    %c0_71 = arith.constant 0 : index
    %c0_72 = arith.constant 0 : index
    %87 = vector.load %arg15[%c0_70, %c0_71, %c0_72] : memref<2x34x128xbf16, #tpu.memory_space<vmem>>, vector<2x32x128xbf16>
    %88 = vector.shape_cast %87 : vector<2x32x128xbf16> to vector<64x128xbf16>
    %c0_73 = arith.constant 0 : index
    %c1_74 = arith.constant 1 : index
    %c0_75 = arith.constant 0 : index
    %89 = vector.load %arg15[%c0_73, %c1_74, %c0_75] : memref<2x34x128xbf16, #tpu.memory_space<vmem>>, vector<2x32x128xbf16>
    %90 = vector.shape_cast %89 : vector<2x32x128xbf16> to vector<64x128xbf16>
    %c0_76 = arith.constant 0 : index
    %c2_77 = arith.constant 2 : index
    %c0_78 = arith.constant 0 : index
    %91 = vector.load %arg15[%c0_76, %c2_77, %c0_78] : memref<2x34x128xbf16, #tpu.memory_space<vmem>>, vector<2x32x128xbf16>
    %92 = vector.shape_cast %91 : vector<2x32x128xbf16> to vector<64x128xbf16>
    %93 = tpu.concatenate %88, %90, %92 in 1 : vector<64x128xbf16>, vector<64x128xbf16>, vector<64x128xbf16> -> vector<64x384xbf16>
    %c0_79 = arith.constant 0 : index
    %c0_80 = arith.constant 0 : index
    %94 = vector.load %arg7[%c0_79, %c0_80] : memref<384x128xbf16, #tpu.memory_space<vmem>>, vector<384x128xbf16>
    %cst_81 = arith.constant dense<0.000000e+00> : vector<64x128xf32>
    %95 = tpu.matmul %93, %94, %cst_81 {dimension_numbers = #tpu.dot_dimension_numbers<[1], [0], [0], [1], [0, 0, 1, 1], [], []>} : vector<64x384xbf16>, vector<384x128xbf16>, vector<64x128xf32> -> vector<64x128xf32>
    %cst_82 = arith.constant dense<0.000000e+00> : vector<128xf32>
    %96 = vector.multi_reduction <add>, %95, %cst_82 [0] : vector<64x128xf32> to vector<128xf32>
    %97 = vector.shape_cast %96 : vector<128xf32> to vector<1x128xf32>
    %98 = arith.mulf %95, %95 : vector<64x128xf32>
    %cst_83 = arith.constant dense<0.000000e+00> : vector<128xf32>
    %99 = vector.multi_reduction <add>, %98, %cst_83 [0] : vector<64x128xf32> to vector<128xf32>
    %100 = vector.shape_cast %99 : vector<128xf32> to vector<1x128xf32>
    %101 = tpu.concatenate %97, %100 in 0 : vector<1x128xf32>, vector<1x128xf32> -> vector<2x128xf32>
    %c0_84 = arith.constant 0 : index
    %c0_85 = arith.constant 0 : index
    %102 = vector.load %arg12[%c0_84, %c0_85] : memref<128x4xf32, #tpu.memory_space<vmem>>, vector<128x4xf32>
    %cst_86 = arith.constant dense<0.000000e+00> : vector<2x4xf32>
    %103 = tpu.matmul %101, %102, %cst_86 {dimension_numbers = #tpu.dot_dimension_numbers<[1], [0], [0], [1], [0, 0, 1, 1], [], []>} : vector<2x128xf32>, vector<128x4xf32>, vector<2x4xf32> -> vector<2x4xf32>
    %cst_87 = arith.constant 4.8828125E-4 : f32
    %104 = vector.broadcast %cst_87 : f32 to vector<2x4xf32>
    %105 = arith.mulf %103, %104 : vector<2x4xf32>
    %106 = vector.extract_strided_slice %105 {offsets = [0, 0], sizes = [1, 4], strides = [1, 1]} : vector<2x4xf32> to vector<1x4xf32>
    %107 = vector.extract_strided_slice %105 {offsets = [1, 0], sizes = [1, 4], strides = [1, 1]} : vector<2x4xf32> to vector<1x4xf32>
    %108 = arith.mulf %106, %106 : vector<1x4xf32>
    %109 = arith.subf %107, %108 : vector<1x4xf32>
    %cst_88 = arith.constant 0.000000e+00 : f32
    %110 = vector.broadcast %cst_88 : f32 to vector<1x4xf32>
    %111 = arith.maximumf %109, %110 : vector<1x4xf32>
    %c0_89 = arith.constant 0 : index
    %c0_90 = arith.constant 0 : index
    %112 = vector.load %arg10[%c0_89, %c0_90] : memref<1x4xf32, #tpu.memory_space<vmem>>, vector<1x4xf32>
    %cst_91 = arith.constant 9.99999974E-6 : f32
    %113 = vector.broadcast %cst_91 : f32 to vector<1x4xf32>
    %114 = arith.addf %111, %113 : vector<1x4xf32>
    %115 = math.rsqrt %114 : vector<1x4xf32>
    %116 = arith.mulf %112, %115 : vector<1x4xf32>
    %c0_92 = arith.constant 0 : index
    %c0_93 = arith.constant 0 : index
    %117 = vector.load %arg11[%c0_92, %c0_93] : memref<1x4xf32, #tpu.memory_space<vmem>>, vector<1x4xf32>
    %118 = arith.mulf %106, %116 : vector<1x4xf32>
    %119 = arith.subf %117, %118 : vector<1x4xf32>
    %120 = tpu.concatenate %116, %119 in 0 : vector<1x4xf32>, vector<1x4xf32> -> vector<2x4xf32>
    %c0_94 = arith.constant 0 : index
    %c0_95 = arith.constant 0 : index
    %121 = vector.load %arg13[%c0_94, %c0_95] : memref<4x128xf32, #tpu.memory_space<vmem>>, vector<4x128xf32>
    %cst_96 = arith.constant dense<0.000000e+00> : vector<2x128xf32>
    %122 = tpu.matmul %120, %121, %cst_96 {dimension_numbers = #tpu.dot_dimension_numbers<[1], [0], [0], [1], [0, 0, 1, 1], [], []>} : vector<2x4xf32>, vector<4x128xf32>, vector<2x128xf32> -> vector<2x128xf32>
    %123 = vector.extract_strided_slice %122 {offsets = [0, 0], sizes = [1, 128], strides = [1, 1]} : vector<2x128xf32> to vector<1x128xf32>
    %124 = vector.broadcast %123 : vector<1x128xf32> to vector<64x128xf32>
    %125 = arith.mulf %95, %124 : vector<64x128xf32>
    %126 = vector.extract_strided_slice %122 {offsets = [1, 0], sizes = [1, 128], strides = [1, 1]} : vector<2x128xf32> to vector<1x128xf32>
    %127 = vector.broadcast %126 : vector<1x128xf32> to vector<64x128xf32>
    %128 = arith.addf %125, %127 : vector<64x128xf32>
    %cst_97 = arith.constant 0.000000e+00 : f32
    %129 = vector.broadcast %cst_97 : f32 to vector<64x128xf32>
    %130 = arith.maximumf %128, %129 : vector<64x128xf32>
    %c0_98 = arith.constant 0 : index
    %c0_99 = arith.constant 0 : index
    %131 = vector.load %arg14[%c0_98, %c0_99] : memref<64x128xf32, #tpu.memory_space<vmem>>, vector<64x128xf32>
    tpu.vector_store %arg14[%c0_98, %c0_99], %130 {strides = array<i32>} : memref<64x128xf32, #tpu.memory_space<vmem>>, vector<64x128xf32>,
    return
  }
}

</mosaic_0001>

<llo_original>
// kernel: upsampler_forward.1
$region0: #{upsampler_forward.1}
  #allocation0 [shape = 'u32[]', space=smem, size = 0x4, offset = 0x4, fixed_abs, tag = 'smem constant byte address 0x4 - core index']
  #allocation1 [shape = 'u32[72,128]{1,0:T(1,128)}', space=vmem, size = 0x9000, scoped, tag = 'internal scratch']
  #allocation2 [shape = 'bf16[2,34,128]{2,1,0:T(8,128)(2,1)}', space=vmem, size = 0x5000, scoped, tag = 'scratch operand']
  #allocation3 [shape = 'bf16[2,34,128]{2,1,0:T(8,128)(2,1)}', space=vmem, size = 0x5000, scoped, tag = 'scratch operand']
  %s0 = inlined_call_operand.vmem [shape: f32[2,32,128], index: 0, kind: input, shape index: {}]
  %s1 = inlined_call_operand.vmem [shape: f32[32,128], index: 1, kind: input, shape index: {}]
  %s2 = inlined_call_operand.vmem [shape: bf16[128,256], index: 2, kind: input, shape index: {}]
  %s3 = inlined_call_operand.vmem [shape: bf16[64,32], index: 3, kind: input, shape index: {}]
  %s4 = inlined_call_operand.vmem [shape: bf16[64,32], index: 4, kind: input, shape index: {}]
  %s5 = inlined_call_operand.vmem [shape: f32[1,128], index: 5, kind: input, shape index: {}]
  %s6 = inlined_call_operand.vmem [shape: bf16[768,128], index: 6, kind: input, shape index: {}]
  %s7 = inlined_call_operand.vmem [shape: bf16[384,128], index: 7, kind: input, shape index: {}]
  %s8 = inlined_call_operand.vmem [shape: f32[1,4], index: 8, kind: input, shape index: {}]
  %s9 = inlined_call_operand.vmem [shape: f32[1,4], index: 9, kind: input, shape index: {}]
  %s10 = inlined_call_operand.vmem [shape: f32[1,4], index: 10, kind: input, shape index: {}]
  %s11 = inlined_call_operand.vmem [shape: f32[1,4], index: 11, kind: input, shape index: {}]
  %s12 = inlined_call_operand.vmem [shape: f32[128,4], index: 12, kind: input, shape index: {}]
  %s13 = inlined_call_operand.vmem [shape: f32[4,128], index: 13, kind: input, shape index: {}]
  %s14 = inlined_call_operand.vmem [shape: f32[64,128], index: 14, kind: output, shape index: {}]
  %s15 = sld [smem:[#allocation0]]
  $region66: #{upsampler_forward.1} parent=0
    _
  %s17 = ssub.s32 1, %s15
  %s18 = scalar_select 0, %s17, %s15
  // Predicated region
  $region2: #{upsampler_forward.1} parent=0 // pred_check
    _
  $region3: #{upsampler_forward.1} parent=0 // pred_check_branch
    %20 = sbr.rel (0) target = $region5
  $region4: #{upsampler_forward.1} parent=0 // pred_region
    _
  $region5: #{upsampler_forward.1} parent=0 // pred_fallthru
    _
  // Predicated region
  $region6: #{upsampler_forward.1} parent=0 // pred_check
    _
  $region7: #{upsampler_forward.1} parent=0 // pred_check_branch
    %22 = sbr.rel (0) target = $region9
  $region8: #{upsampler_forward.1} parent=0 // pred_region
    _
  $region9: #{upsampler_forward.1} parent=0 // pred_fallthru
    _
  // Predicated region
  $region10: #{upsampler_forward.1} parent=0 // pred_check
    _
  $region11: #{upsampler_forward.1} parent=0 // pred_check_branch
    %24 = sbr.rel (0) target = $region13
  $region12: #{upsampler_forward.1} parent=0 // pred_region
    _
  $region13: #{upsampler_forward.1} parent=0 // pred_fallthru
    _
  // Predicated region
  $region14: #{upsampler_forward.1} parent=0 // pred_check
    _
  $region15: #{upsampler_forward.1} parent=0 // pred_check_branch
    %26 = sbr.rel (0) target = $region17
  $region16: #{upsampler_forward.1} parent=0 // pred_region
    _
  $region17: #{upsampler_forward.1} parent=0 // pred_fallthru
    _
  // Predicated region
  $region18: #{upsampler_forward.1} parent=0 // pred_check
    _
  $region19: #{upsampler_forward.1} parent=0 // pred_check_branch
    %28 = sbr.rel (0) target = $region21
  $region20: #{upsampler_forward.1} parent=0 // pred_region
    _
  $region21: #{upsampler_forward.1} parent=0 // pred_fallthru
    _
  // Predicated region
  $region22: #{upsampler_forward.1} parent=0 // pred_check
    _
  $region23: #{upsampler_forward.1} parent=0 // pred_check_branch
    %30 = sbr.rel (0) target = $region25
  $region24: #{upsampler_forward.1} parent=0 // pred_region
    _
  $region25: #{upsampler_forward.1} parent=0 // pred_fallthru
    _
  // Predicated region
  $region26: #{upsampler_forward.1} parent=0 // pred_check
    _
  $region27: #{upsampler_forward.1} parent=0 // pred_check_branch
    %32 = sbr.rel (0) target = $region29
  $region28: #{upsampler_forward.1} parent=0 // pred_region
    _
  $region29: #{upsampler_forward.1} parent=0 // pred_fallthru
    _
  // Predicated region
  $region30: #{upsampler_forward.1} parent=0 // pred_check
    _
  $region31: #{upsampler_forward.1} parent=0 // pred_check_branch
    %34 = sbr.rel (0) target = $region33
  $region32: #{upsampler_forward.1} parent=0 // pred_region
    _
  $region33: #{upsampler_forward.1} parent=0 // pred_fallthru
    _
  // Predicated region
  $region34: #{upsampler_forward.1} parent=0 // pred_check
    _
  $region35: #{upsampler_forward.1} parent=0 // pred_check_branch
    %36 = sbr.rel (0) target = $region37
  $region36: #{upsampler_forward.1} parent=0 // pred_region
    _
  $region37: #{upsampler_forward.1} parent=0 // pred_fallthru
    _
  // Predicated region
  $region38: #{upsampler_forward.1} parent=0 // pred_check
    _
  $region39: #{upsampler_forward.1} parent=0 // pred_check_branch
    %38 = sbr.rel (0) target = $region41
  $region40: #{upsampler_forward.1} parent=0 // pred_region
    _
  $region41: #{upsampler_forward.1} parent=0 // pred_fallthru
    _
  // Predicated region
  $region42: #{upsampler_forward.1} parent=0 // pred_check
    _
  $region43: #{upsampler_forward.1} parent=0 // pred_check_branch
    %40 = sbr.rel (0) target = $region45
  $region44: #{upsampler_forward.1} parent=0 // pred_region
    _
  $region45: #{upsampler_forward.1} parent=0 // pred_fallthru
    _
  // Predicated region
  $region46: #{upsampler_forward.1} parent=0 // pred_check
    _
  $region47: #{upsampler_forward.1} parent=0 // pred_check_branch
    %42 = sbr.rel (0) target = $region49
  $region48: #{upsampler_forward.1} parent=0 // pred_region
    _
  $region49: #{upsampler_forward.1} parent=0 // pred_fallthru
    _
  // Predicated region
  $region50: #{upsampler_forward.1} parent=0 // pred_check
    _
  $region51: #{upsampler_forward.1} parent=0 // pred_check_branch
    %44 = sbr.rel (0) target = $region53
  $region52: #{upsampler_forward.1} parent=0 // pred_region
    _
  $region53: #{upsampler_forward.1} parent=0 // pred_fallthru
    _
  // Predicated region
  $region54: #{upsampler_forward.1} parent=0 // pred_check
    _
  $region55: #{upsampler_forward.1} parent=0 // pred_check_branch
    %46 = sbr.rel (0) target = $region57
  $region56: #{upsampler_forward.1} parent=0 // pred_region
    _
  $region57: #{upsampler_forward.1} parent=0 // pred_fallthru
    _
  %v48 = vld [vmem:[%s1] sm:$0xff]
  %v49 = vld [vmem:[%s1 + $0x8] sm:$0xff]
  %v50 = vld [vmem:[%s1 + $0x10] sm:$0xff]
  %v51 = vld [vmem:[%s1 + $0x18] sm:$0xff]
  %v52 = vpack.c.bf16 %v49, %v48
  %v53 = vpack.c.bf16 %v51, %v50
  %v54 = vld [vmem:[%s2] sm:$0xff]
  %v55 = vld [vmem:[%s2 + $0x8] sm:$0xff]
  %v56 = vld [vmem:[%s2 + $0x10] sm:$0xff]
  %v57 = vld [vmem:[%s2 + $0x18] sm:$0xff]
  %v58 = vld [vmem:[%s2 + $0x20] sm:$0xff]
  %v59 = vld [vmem:[%s2 + $0x28] sm:$0xff]
  %v60 = vld [vmem:[%s2 + $0x30] sm:$0xff]
  %v61 = vld [vmem:[%s2 + $0x38] sm:$0xff]
  %v62 = vld [vmem:[%s2 + $0x40] sm:$0xff]
  %v63 = vld [vmem:[%s2 + $0x48] sm:$0xff]
  %v64 = vld [vmem:[%s2 + $0x50] sm:$0xff]
  %v65 = vld [vmem:[%s2 + $0x58] sm:$0xff]
  %v66 = vld [vmem:[%s2 + $0x60] sm:$0xff]
  %v67 = vld [vmem:[%s2 + $0x68] sm:$0xff]
  %v68 = vld [vmem:[%s2 + $0x70] sm:$0xff]
  %v69 = vld [vmem:[%s2 + $0x78] sm:$0xff]
  %v86 = vunpack.c.l.b16 %v54
  %v87 = vunpack.c.h.b16 %v54
  %v88 = vunpack.c.l.b16 %v55
  %v89 = vunpack.c.h.b16 %v55
  %v90 = vunpack.c.l.b16 %v56
  %v91 = vunpack.c.h.b16 %v56
  %v92 = vunpack.c.l.b16 %v57
  %v93 = vunpack.c.h.b16 %v57
  %v94 = vunpack.c.l.b16 %v58
  %v95 = vunpack.c.h.b16 %v58
  %v96 = vunpack.c.l.b16 %v59
  %v97 = vunpack.c.h.b16 %v59
  %v98 = vunpack.c.l.b16 %v60
  %v99 = vunpack.c.h.b16 %v60
  %v100 = vunpack.c.l.b16 %v61
  %v101 = vunpack.c.h.b16 %v61
  %v102 = vunpack.c.l.b16 %v62
  %v103 = vunpack.c.h.b16 %v62
  %v104 = vunpack.c.l.b16 %v63
  %v105 = vunpack.c.h.b16 %v63
  %v106 = vunpack.c.l.b16 %v64
  %v107 = vunpack.c.h.b16 %v64
  %v108 = vunpack.c.l.b16 %v65
  %v109 = vunpack.c.h.b16 %v65
  %v110 = vunpack.c.l.b16 %v66
  %v111 = vunpack.c.h.b16 %v66
  %v112 = vunpack.c.l.b16 %v67
  %v113 = vunpack.c.h.b16 %v67
  %v114 = vunpack.c.l.b16 %v68
  %v115 = vunpack.c.h.b16 %v68
  %v116 = vunpack.c.l.b16 %v69
  %v117 = vunpack.c.h.b16 %v69
  %v118 = vpack.c.b16 %v88, %v86
  %v119 = vpack.c.b16 %v89, %v87
  %v120 = vpack.c.b16 %v92, %v90
  %v121 = vpack.c.b16 %v93, %v91
  %v122 = vpack.c.b16 %v96, %v94
  %v123 = vpack.c.b16 %v97, %v95
  %v124 = vpack.c.b16 %v100, %v98
  %v125 = vpack.c.b16 %v101, %v99
  %v126 = vpack.c.b16 %v104, %v102
  %v127 = vpack.c.b16 %v105, %v103
  %v128 = vpack.c.b16 %v108, %v106
  %v129 = vpack.c.b16 %v109, %v107
  %v130 = vpack.c.b16 %v112, %v110
  %v131 = vpack.c.b16 %v113, %v111
  %v132 = vpack.c.b16 %v116, %v114
  %v133 = vpack.c.b16 %v117, %v115
  %150 = vmatpush.bf16.msra.mxu0 %v132
  %151 = vmatpush.bf16.msra.mxu0 %v130
  %152 = vmatpush.bf16.msra.mxu0 %v128
  %153 = vmatpush.bf16.msra.mxu0 %v126
  %154 = vmatpush.bf16.msra.mxu0 %v124
  %155 = vmatpush.bf16.msra.mxu0 %v122
  %156 = vmatpush.bf16.msra.mxu0 %v120
  %157 = vmatpush.bf16.msra.mxu0 %v118
  %158 = vmatmul.bf16.gmra.mxu0 %v52
  %v159 = vpop.f32.mrf.mxu0
  %v160 = vadd.f32 0.0, %v159
  %v161 = vpop.f32.mrf.mxu0
  %v162 = vadd.f32 0.0, %v161
  %163 = vmatmul.bf16.gmra.mxu0 %v53
  %v164 = vpop.f32.mrf.mxu0
  %v165 = vadd.f32 0.0, %v164
  %v166 = vpop.f32.mrf.mxu0
  %v167 = vadd.f32 0.0, %v166
  %168 = vdwg.mxu0
  %169 = vmatpush.bf16.msra.mxu0 %v133
  %170 = vmatpush.bf16.msra.mxu0 %v131
  %171 = vmatpush.bf16.msra.mxu0 %v129
  %172 = vmatpush.bf16.msra.mxu0 %v127
  %173 = vmatpush.bf16.msra.mxu0 %v125
  %174 = vmatpush.bf16.msra.mxu0 %v123
  %175 = vmatpush.bf16.msra.mxu0 %v121
  %176 = vmatpush.bf16.msra.mxu0 %v119
  %177 = vmatmul.bf16.gmra.mxu0 %v52
  %v178 = vpop.f32.mrf.mxu0
  %v179 = vadd.f32 0.0, %v178
  %v180 = vpop.f32.mrf.mxu0
  %v181 = vadd.f32 0.0, %v180
  %182 = vmatmul.bf16.gmra.mxu0 %v53
  %v183 = vpop.f32.mrf.mxu0
  %v184 = vadd.f32 0.0, %v183
  %v185 = vpop.f32.mrf.mxu0
  %v186 = vadd.f32 0.0, %v185
  %187 = vdwg.mxu0
  %v188 = vpack.c.bf16 %v179, %v160
  %v189 = vpack.c.bf16 %v181, %v162
  %v190 = vpack.c.bf16 %v184, %v165
  %v191 = vpack.c.bf16 %v186, %v167
  %v192 = vld [vmem:[%s3] sm:$0xf]
  %v193 = vld [vmem:[%s3 + $0x4] sm:$0xf]
  %v194 = vld [vmem:[%s3 + $0x8] sm:$0xf]
  %v195 = vld [vmem:[%s3 + $0xc] sm:$0xf]
  %v196 = vld [vmem:[%s3 + $0x10] sm:$0xf]
  %v197 = vld [vmem:[%s3 + $0x14] sm:$0xf]
  %v198 = vld [vmem:[%s3 + $0x18] sm:$0xf]
  %v199 = vld [vmem:[%s3 + $0x1c] sm:$0xf]
  %v200 = vld [vmem:[%s4] sm:$0xf]
  %v201 = vld [vmem:[%s4 + $0x4] sm:$0xf]
  %v202 = vld [vmem:[%s4 + $0x8] sm:$0xf]
  %v203 = vld [vmem:[%s4 + $0xc] sm:$0xf]
  %v204 = vld [vmem:[%s4 + $0x10] sm:$0xf]
  %v205 = vld [vmem:[%s4 + $0x14] sm:$0xf]
  %v206 = vld [vmem:[%s4 + $0x18] sm:$0xf]
  %v207 = vld [vmem:[%s4 + $0x1c] sm:$0xf]
  %v216 = vunpack.c.l.b16 %v200
  %v217 = vunpack.c.l.b16 %v201
  %v218 = vunpack.c.l.b16 %v202
  %v219 = vunpack.c.l.b16 %v203
  %v220 = vunpack.c.l.b16 %v204
  %v221 = vunpack.c.l.b16 %v205
  %v222 = vunpack.c.l.b16 %v206
  %v223 = vunpack.c.l.b16 %v207
  %v224 = vpack.c.b16 %v217, %v216
  %v225 = vpack.c.b16 %v219, %v218
  %v226 = vpack.c.b16 %v221, %v220
  %v227 = vpack.c.b16 %v223, %v222
  %v232 = vunpack.c.h.b16 %v188
  %v233 = vunpack.c.h.b16 %v189
  %v234 = vunpack.c.h.b16 %v190
  %v235 = vunpack.c.h.b16 %v191
  %v236 = vpack.c.b16 %v233, %v232
  %v237 = vpack.c.b16 %v235, %v234
  %vm240 = vcmask 261120
  %v242 = vsel %vm240, %v224, 0
  %v245 = vsel %vm240, %v225, 0
  %v248 = vsel %vm240, %v226, 0
  %v251 = vsel %vm240, %v227, 0
  %253 = vmatpush.bf16.msra.mxu0 0
  %254 = vmatpush.bf16.msra.mxu0 0
  %255 = vmatpush.bf16.msra.mxu0 0
  %256 = vmatpush.bf16.msra.mxu0 0
  %257 = vmatpush.bf16.msra.mxu0 0
  %258 = vmatpush.bf16.msra.mxu0 0
  %259 = vmatpush.bf16.msra.mxu0 %v237
  %260 = vmatpush.bf16.msra.mxu0 %v236
  %261 = vmatmul.bf16.gmra.mxu0 %v242
  %v262 = vpop.f32.mrf.mxu0
  %v263 = vadd.f32 0.0, %v262
  %v264 = vpop.f32.mrf.mxu0
  %v265 = vadd.f32 0.0, %v264
  %266 = vmatmul.bf16.gmra.mxu0 %v245
  %v267 = vpop.f32.mrf.mxu0
  %v268 = vadd.f32 0.0, %v267
  %v269 = vpop.f32.mrf.mxu0
  %v270 = vadd.f32 0.0, %v269
  %271 = vmatmul.bf16.gmra.mxu0 %v248
  %v272 = vpop.f32.mrf.mxu0
  %v273 = vadd.f32 0.0, %v272
  %v274 = vpop.f32.mrf.mxu0
  %v275 = vadd.f32 0.0, %v274
  %276 = vmatmul.bf16.gmra.mxu0 %v251
  %v277 = vpop.f32.mrf.mxu0
  %v278 = vadd.f32 0.0, %v277
  %v279 = vpop.f32.mrf.mxu0
  %v280 = vadd.f32 0.0, %v279
  %281 = vdwg.mxu0
  %v290 = vunpack.c.l.b16 %v192
  %v291 = vunpack.c.l.b16 %v193
  %v292 = vunpack.c.l.b16 %v194
  %v293 = vunpack.c.l.b16 %v195
  %v294 = vunpack.c.l.b16 %v196
  %v295 = vunpack.c.l.b16 %v197
  %v296 = vunpack.c.l.b16 %v198
  %v297 = vunpack.c.l.b16 %v199
  %v298 = vpack.c.b16 %v291, %v290
  %v299 = vpack.c.b16 %v293, %v292
  %v300 = vpack.c.b16 %v295, %v294
  %v301 = vpack.c.b16 %v297, %v296
  %v302 = vunpack.c.l.b16 %v188
  %v303 = vunpack.c.l.b16 %v189
  %v304 = vunpack.c.l.b16 %v190
  %v305 = vunpack.c.l.b16 %v191
  %v306 = vpack.c.b16 %v303, %v302
  %v307 = vpack.c.b16 %v305, %v304
  %v311 = vsel %vm240, %v298, 0
  %v314 = vsel %vm240, %v299, 0
  %v317 = vsel %vm240, %v300, 0
  %v320 = vsel %vm240, %v301, 0
  %322 = vmatpush.bf16.msra.mxu0 0
  %323 = vmatpush.bf16.msra.mxu0 0
  %324 = vmatpush.bf16.msra.mxu0 0
  %325 = vmatpush.bf16.msra.mxu0 0
  %326 = vmatpush.bf16.msra.mxu0 0
  %327 = vmatpush.bf16.msra.mxu0 0
  %328 = vmatpush.bf16.msra.mxu0 %v307
  %329 = vmatpush.bf16.msra.mxu0 %v306
  %330 = vmatmul.bf16.gmra.mxu0 %v311
  %v331 = vpop.f32.mrf.mxu0
  %v332 = vadd.f32 %v263, %v331
  %v333 = vpop.f32.mrf.mxu0
  %v334 = vadd.f32 %v265, %v333
  %335 = vmatmul.bf16.gmra.mxu0 %v314
  %v336 = vpop.f32.mrf.mxu0
  %v337 = vadd.f32 %v268, %v336
  %v338 = vpop.f32.mrf.mxu0
  %v339 = vadd.f32 %v270, %v338
  %340 = vmatmul.bf16.gmra.mxu0 %v317
  %v341 = vpop.f32.mrf.mxu0
  %v342 = vadd.f32 %v273, %v341
  %v343 = vpop.f32.mrf.mxu0
  %v344 = vadd.f32 %v275, %v343
  %345 = vmatmul.bf16.gmra.mxu0 %v320
  %v346 = vpop.f32.mrf.mxu0
  %v347 = vadd.f32 %v278, %v346
  %v348 = vpop.f32.mrf.mxu0
  %v349 = vadd.f32 %v280, %v348
  %350 = vdwg.mxu0
  %v351 = vld [vmem:[%s5] sm:$0x1]
  %v353 = vperm.slane %v351, 0
  %v355 = vadd.f32 %v332, %v353
  %v356 = vadd.f32 %v334, %v353
  %v357 = vadd.f32 %v337, %v353
  %v358 = vadd.f32 %v339, %v353
  %v359 = vadd.f32 %v342, %v353
  %v360 = vadd.f32 %v344, %v353
  %v361 = vadd.f32 %v347, %v353
  %v362 = vadd.f32 %v349, %v353
  %vm363 = vcmask 1040384
  %vm364 = vsmask.f32 256
  %vm365 = vmand %vm363, %vm364
  %v366 = vld [vmem:[#allocation2] sm:$0x1]
  %v367 = vsel %vm365, 0, %v366
  %368 = vst [vmem:[#allocation2] sm:$0x1] %v367
  %v369 = vld [vmem:[#allocation2 + $0x14] sm:$0x1]
  %v370 = vsel %vm365, 0, %v369
  %371 = vst [vmem:[#allocation2 + $0x14] sm:$0x1] %v370
  %vm372 = vsmask.f32 7938
  %vm373 = vmand %vm363, %vm372
  %v374 = vld [vmem:[#allocation2 + $0x10] sm:$0x1]
  %v375 = vsel %vm373, 0, %v374
  %376 = vst [vmem:[#allocation2 + $0x10] sm:$0x1] %v375
  %v377 = vld [vmem:[#allocation2 + $0x24] sm:$0x1]
  %v378 = vsel %vm373, 0, %v377
  %379 = vst [vmem:[#allocation2 + $0x24] sm:$0x1] %v378
  %v380 = vld [vmem:[#allocation3] sm:$0x1]
  %v381 = vsel %vm365, 0, %v380
  %382 = vst [vmem:[#allocation3] sm:$0x1] %v381
  %v383 = vld [vmem:[#allocation3 + $0x14] sm:$0x1]
  %v384 = vsel %vm365, 0, %v383
  %385 = vst [vmem:[#allocation3 + $0x14] sm:$0x1] %v384
  %v386 = vld [vmem:[#allocation3 + $0x10] sm:$0x1]
  %v387 = vsel %vm373, 0, %v386
  %388 = vst [vmem:[#allocation3 + $0x10] sm:$0x1] %v387
  %v389 = vld [vmem:[#allocation3 + $0x24] sm:$0x1]
  %v390 = vsel %vm373, 0, %v389
  %391 = vst [vmem:[#allocation3 + $0x24] sm:$0x1] %v390
  %v392 = vld [vmem:[%s0] sm:$0xff]
  %v393 = vld [vmem:[%s0 + $0x8] sm:$0xff]
  %v394 = vld [vmem:[%s0 + $0x10] sm:$0xff]
  %v395 = vld [vmem:[%s0 + $0x18] sm:$0xff]
  %v396 = vld [vmem:[%s0 + $0x20] sm:$0xff]
  %v397 = vld [vmem:[%s0 + $0x28] sm:$0xff]
  %v398 = vld [vmem:[%s0 + $0x30] sm:$0xff]
  %v399 = vld [vmem:[%s0 + $0x38] sm:$0xff]
  %v400 = vpack.c.bf16 %v392, %v392
  %v401 = vpack.c.bf16 %v393, %v393
  %v402 = vpack.c.bf16 %v394, %v394
  %v403 = vpack.c.bf16 %v395, %v395
  %v404 = vpack.c.bf16 %v396, %v396
  %v405 = vpack.c.bf16 %v397, %v397
  %v406 = vpack.c.bf16 %v398, %v398
  %v407 = vpack.c.bf16 %v399, %v399
  %vm408 = vsmask.f32 4368
  %vm409 = vmor %vm364, %vm408
  %v411 = vshrl.u32 %v400, 16
  %v413 = vrot.slane %v411, 7
  %v414 = vshll.u32 %v400, 16
  %v416 = vor.u32 %v413, %v414
  %v417 = vrot.slane %v413, 4
  %v419 = vshrl.u32 %v401, 16
  %v421 = vrot.slane %v419, 7
  %v422 = vshll.u32 %v401, 16
  %v424 = vor.u32 %v421, %v422
  %v425 = vsel %vm409, %v417, %v424
  %v426 = vrot.slane %v421, 4
  %v428 = vshrl.u32 %v402, 16
  %v430 = vrot.slane %v428, 7
  %v431 = vshll.u32 %v402, 16
  %v433 = vor.u32 %v430, %v431
  %v434 = vsel %vm409, %v426, %v433
  %v435 = vrot.slane %v430, 4
  %v437 = vshrl.u32 %v403, 16
  %v439 = vrot.slane %v437, 7
  %v440 = vshll.u32 %v403, 16
  %v442 = vor.u32 %v439, %v440
  %v443 = vsel %vm409, %v435, %v442
  %v444 = vrot.slane %v439, 4
  %v446 = vshrl.u32 %v404, 16
  %v448 = vrot.slane %v446, 7
  %v449 = vshll.u32 %v404, 16
  %v451 = vor.u32 %v448, %v449
  %v452 = vrot.slane %v448, 4
  %v454 = vshrl.u32 %v405, 16
  %v456 = vrot.slane %v454, 7
  %v457 = vshll.u32 %v405, 16
  %v459 = vor.u32 %v456, %v457
  %v460 = vsel %vm409, %v452, %v459
  %v461 = vrot.slane %v456, 4
  %v463 = vshrl.u32 %v406, 16
  %v465 = vrot.slane %v463, 7
  %v466 = vshll.u32 %v406, 16
  %v468 = vor.u32 %v465, %v466
  %v469 = vsel %vm409, %v461, %v468
  %v470 = vrot.slane %v465, 4
  %v472 = vshrl.u32 %v407, 16
  %v474 = vrot.slane %v472, 7
  %v475 = vshll.u32 %v407, 16
  %v477 = vor.u32 %v474, %v475
  %v478 = vsel %vm409, %v470, %v477
  %v479 = vrot.slane %v474, 4
  %vm490 = vcmask 1043456
  %vm491 = vmand %vm490, %vm372
  %v492 = vld [vmem:[#allocation2] sm:$0xf]
  %v493 = vsel %vm491, %v416, %v492
  %494 = vst [vmem:[#allocation2] sm:$0xf] %v493
  %495 = vst [vmem:[#allocation2 + $0x4] sm:$0xf] %v425
  %496 = vst [vmem:[#allocation2 + $0x8] sm:$0xf] %v434
  %497 = vst [vmem:[#allocation2 + $0xc] sm:$0xf] %v443
  %v498 = vld [vmem:[#allocation2 + $0x10] sm:$0x1]
  %v499 = vsel %vm365, %v444, %v498
  %500 = vst [vmem:[#allocation2 + $0x10] sm:$0x1] %v499
  %v501 = vld [vmem:[#allocation2 + $0x14] sm:$0xf]
  %v502 = vsel %vm491, %v451, %v501
  %503 = vst [vmem:[#allocation2 + $0x14] sm:$0xf] %v502
  %504 = vst [vmem:[#allocation2 + $0x18] sm:$0xf] %v460
  %505 = vst [vmem:[#allocation2 + $0x1c] sm:$0xf] %v469
  %506 = vst [vmem:[#allocation2 + $0x20] sm:$0xf] %v478
  %v507 = vld [vmem:[#allocation2 + $0x24] sm:$0x1]
  %v508 = vsel %vm365, %v479, %v507
  %509 = vst [vmem:[#allocation2 + $0x24] sm:$0x1] %v508
  %v510 = vpack.c.bf16 %v355, %v355
  %v511 = vpack.c.bf16 %v356, %v356
  %v512 = vpack.c.bf16 %v357, %v357
  %v513 = vpack.c.bf16 %v358, %v358
  %v514 = vpack.c.bf16 %v359, %v359
  %v515 = vpack.c.bf16 %v360, %v360
  %v516 = vpack.c.bf16 %v361, %v361
  %v517 = vpack.c.bf16 %v362, %v362
  %v519 = vshrl.u32 %v510, 16
  %v521 = vrot.slane %v519, 7
  %v522 = vshll.u32 %v510, 16
  %v524 = vor.u32 %v521, %v522
  %v525 = vrot.slane %v521, 4
  %v527 = vshrl.u32 %v511, 16
  %v529 = vrot.slane %v527, 7
  %v530 = vshll.u32 %v511, 16
  %v532 = vor.u32 %v529, %v530
  %v533 = vsel %vm409, %v525, %v532
  %v534 = vrot.slane %v529, 4
  %v536 = vshrl.u32 %v512, 16
  %v538 = vrot.slane %v536, 7
  %v539 = vshll.u32 %v512, 16
  %v541 = vor.u32 %v538, %v539
  %v542 = vsel %vm409, %v534, %v541
  %v543 = vrot.slane %v538, 4
  %v545 = vshrl.u32 %v513, 16
  %v547 = vrot.slane %v545, 7
  %v548 = vshll.u32 %v513, 16
  %v550 = vor.u32 %v547, %v548
  %v551 = vsel %vm409, %v543, %v550
  %v552 = vrot.slane %v547, 4
  %v554 = vshrl.u32 %v514, 16
  %v556 = vrot.slane %v554, 7
  %v557 = vshll.u32 %v514, 16
  %v559 = vor.u32 %v556, %v557
  %v560 = vrot.slane %v556, 4
  %v562 = vshrl.u32 %v515, 16
  %v564 = vrot.slane %v562, 7
  %v565 = vshll.u32 %v515, 16
  %v567 = vor.u32 %v564, %v565
  %v568 = vsel %vm409, %v560, %v567
  %v569 = vrot.slane %v564, 4
  %v571 = vshrl.u32 %v516, 16
  %v573 = vrot.slane %v571, 7
  %v574 = vshll.u32 %v516, 16
  %v576 = vor.u32 %v573, %v574
  %v577 = vsel %vm409, %v569, %v576
  %v578 = vrot.slane %v573, 4
  %v580 = vshrl.u32 %v517, 16
  %v582 = vrot.slane %v580, 7
  %v583 = vshll.u32 %v517, 16
  %v585 = vor.u32 %v582, %v583
  %v586 = vsel %vm409, %v578, %v585
  %v587 = vrot.slane %v582, 4
  %v598 = vld [vmem:[#allocation3] sm:$0xf]
  %v599 = vsel %vm491, %v524, %v598
  %600 = vst [vmem:[#allocation3] sm:$0xf] %v599
  %601 = vst [vmem:[#allocation3 + $0x4] sm:$0xf] %v533
  %602 = vst [vmem:[#allocation3 + $0x8] sm:$0xf] %v542
  %603 = vst [vmem:[#allocation3 + $0xc] sm:$0xf] %v551
  %v604 = vld [vmem:[#allocation3 + $0x10] sm:$0x1]
  %v605 = vsel %vm365, %v552, %v604
  %606 = vst [vmem:[#allocation3 + $0x10] sm:$0x1] %v605
  %v607 = vld [vmem:[#allocation3 + $0x14] sm:$0xf]
  %v608 = vsel %vm491, %v559, %v607
  %609 = vst [vmem:[#allocation3 + $0x14] sm:$0xf] %v608
  %610 = vst [vmem:[#allocation3 + $0x18] sm:$0xf] %v568
  %611 = vst [vmem:[#allocation3 + $0x1c] sm:$0xf] %v577
  %612 = vst [vmem:[#allocation3 + $0x20] sm:$0xf] %v586
  %v613 = vld [vmem:[#allocation3 + $0x24] sm:$0x1]
  %v614 = vsel %vm365, %v587, %v613
  %615 = vst [vmem:[#allocation3 + $0x24] sm:$0x1] %v614
  %v616 = vld [vmem:[#allocation2] sm:$0xf]
  %v617 = vld [vmem:[#allocation2 + $0x4] sm:$0xf]
  %v618 = vld [vmem:[#allocation2 + $0x8] sm:$0xf]
  %v619 = vld [vmem:[#allocation2 + $0xc] sm:$0xf]
  %v620 = vld [vmem:[#allocation2 + $0x14] sm:$0xf]
  %v621 = vld [vmem:[#allocation2 + $0x18] sm:$0xf]
  %v622 = vld [vmem:[#allocation2 + $0x1c] sm:$0xf]
  %v623 = vld [vmem:[#allocation2 + $0x20] sm:$0xf]
  %v624 = vld [vmem:[#allocation2 + $0x10] sm:$0x1]
  %v625 = vld [vmem:[#allocation2 + $0x24] sm:$0x1]
  %vm626 = vsmask.f32 3328
  %vm627 = vsmask.f32 7440
  %vm628 = vmor %vm626, %vm627
  %v630 = vshrl.u32 %v616, 16
  %v632 = vrot.slane %v630, 4
  %v633 = vshll.u32 %v616, 16
  %v635 = vrot.slane %v633, 5
  %v636 = vor.u32 %v632, %v635
  %v637 = vrot.slane %v636, 4
  %v639 = vshll.u32 %v617, 16
  %v641 = vrot.slane %v639, 5
  %v642 = vsel %vm628, %v637, %v641
  %v643 = vshrl.u32 %v617, 16
  %v645 = vrot.slane %v643, 4
  %v646 = vor.u32 %v645, %v641
  %v647 = vrot.slane %v646, 4
  %v649 = vshll.u32 %v618, 16
  %v651 = vrot.slane %v649, 5
  %v652 = vsel %vm628, %v647, %v651
  %v653 = vshrl.u32 %v618, 16
  %v655 = vrot.slane %v653, 4
  %v656 = vor.u32 %v655, %v651
  %v657 = vrot.slane %v656, 4
  %v659 = vshll.u32 %v619, 16
  %v661 = vrot.slane %v659, 5
  %v662 = vsel %vm628, %v657, %v661
  %v663 = vshrl.u32 %v619, 16
  %v665 = vrot.slane %v663, 4
  %v666 = vor.u32 %v665, %v661
  %v667 = vrot.slane %v666, 4
  %v669 = vshll.u32 %v624, 16
  %v671 = vrot.slane %v669, 5
  %v672 = vsel %vm628, %v667, %v671
  %v674 = vshrl.u32 %v620, 16
  %v676 = vrot.slane %v674, 4
  %v677 = vshll.u32 %v620, 16
  %v679 = vrot.slane %v677, 5
  %v680 = vor.u32 %v676, %v679
  %v681 = vrot.slane %v680, 4
  %v683 = vshll.u32 %v621, 16
  %v685 = vrot.slane %v683, 5
  %v686 = vsel %vm628, %v681, %v685
  %v687 = vshrl.u32 %v621, 16
  %v689 = vrot.slane %v687, 4
  %v690 = vor.u32 %v689, %v685
  %v691 = vrot.slane %v690, 4
  %v693 = vshll.u32 %v622, 16
  %v695 = vrot.slane %v693, 5
  %v696 = vsel %vm628, %v691, %v695
  %v697 = vshrl.u32 %v622, 16
  %v699 = vrot.slane %v697, 4
  %v700 = vor.u32 %v699, %v695
  %v701 = vrot.slane %v700, 4
  %v703 = vshll.u32 %v623, 16
  %v705 = vrot.slane %v703, 5
  %v706 = vsel %vm628, %v701, %v705
  %v707 = vshrl.u32 %v623, 16
  %v709 = vrot.slane %v707, 4
  %v710 = vor.u32 %v709, %v705
  %v711 = vrot.slane %v710, 4
  %v713 = vshll.u32 %v625, 16
  %v715 = vrot.slane %v713, 5
  %v716 = vsel %vm628, %v711, %v715
  %v717 = vld [vmem:[#allocation2] sm:$0xe]
  %v718 = vld [vmem:[#allocation2 + $0x14] sm:$0xe]
  %vm729 = vcmask 1042432
  %vm730 = vcmask 1046532
  %vm731 = vmor %vm729, %vm730
  %v732 = vrot.slane %v717, 5
  %v733 = vrot.slane %v732, 4
  %v734 = vrot.slane %v617, 5
  %v735 = vsel %vm731, %v733, %v734
  %v736 = vrot.slane %v734, 4
  %v737 = vrot.slane %v618, 5
  %v738 = vsel %vm731, %v736, %v737
  %v739 = vrot.slane %v737, 4
  %v740 = vrot.slane %v619, 5
  %v741 = vsel %vm731, %v739, %v740
  %v742 = vrot.slane %v740, 4
  %v743 = vrot.slane %v624, 5
  %v744 = vsel %vm731, %v742, %v743
  %v745 = vrot.slane %v718, 5
  %v746 = vrot.slane %v745, 4
  %v747 = vrot.slane %v621, 5
  %v748 = vsel %vm731, %v746, %v747
  %v749 = vrot.slane %v747, 4
  %v750 = vrot.slane %v622, 5
  %v751 = vsel %vm731, %v749, %v750
  %v752 = vrot.slane %v750, 4
  %v753 = vrot.slane %v623, 5
  %v754 = vsel %vm731, %v752, %v753
  %v755 = vrot.slane %v753, 4
  %v756 = vrot.slane %v625, 5
  %v757 = vsel %vm731, %v755, %v756
  %v758 = vld [vmem:[#allocation3] sm:$0xf]
  %v759 = vld [vmem:[#allocation3 + $0x4] sm:$0xf]
  %v760 = vld [vmem:[#allocation3 + $0x8] sm:$0xf]
  %v761 = vld [vmem:[#allocation3 + $0xc] sm:$0xf]
  %v762 = vld [vmem:[#allocation3 + $0x14] sm:$0xf]
  %v763 = vld [vmem:[#allocation3 + $0x18] sm:$0xf]
  %v764 = vld [vmem:[#allocation3 + $0x1c] sm:$0xf]
  %v765 = vld [vmem:[#allocation3 + $0x20] sm:$0xf]
  %v766 = vld [vmem:[#allocation3 + $0x10] sm:$0x1]
  %v767 = vld [vmem:[#allocation3 + $0x24] sm:$0x1]
  %v769 = vshrl.u32 %v758, 16
  %v771 = vrot.slane %v769, 4
  %v772 = vshll.u32 %v758, 16
  %v774 = vrot.slane %v772, 5
  %v775 = vor.u32 %v771, %v774
  %v776 = vrot.slane %v775, 4
  %v778 = vshll.u32 %v759, 16
  %v780 = vrot.slane %v778, 5
  %v781 = vsel %vm628, %v776, %v780
  %v782 = vshrl.u32 %v759, 16
  %v784 = vrot.slane %v782, 4
  %v785 = vor.u32 %v784, %v780
  %v786 = vrot.slane %v785, 4
  %v788 = vshll.u32 %v760, 16
  %v790 = vrot.slane %v788, 5
  %v791 = vsel %vm628, %v786, %v790
  %v792 = vshrl.u32 %v760, 16
  %v794 = vrot.slane %v792, 4
  %v795 = vor.u32 %v794, %v790
  %v796 = vrot.slane %v795, 4
  %v798 = vshll.u32 %v761, 16
  %v800 = vrot.slane %v798, 5
  %v801 = vsel %vm628, %v796, %v800
  %v802 = vshrl.u32 %v761, 16
  %v804 = vrot.slane %v802, 4
  %v805 = vor.u32 %v804, %v800
  %v806 = vrot.slane %v805, 4
  %v808 = vshll.u32 %v766, 16
  %v810 = vrot.slane %v808, 5
  %v811 = vsel %vm628, %v806, %v810
  %v813 = vshrl.u32 %v762, 16
  %v815 = vrot.slane %v813, 4
  %v816 = vshll.u32 %v762, 16
  %v818 = vrot.slane %v816, 5
  %v819 = vor.u32 %v815, %v818
  %v820 = vrot.slane %v819, 4
  %v822 = vshll.u32 %v763, 16
  %v824 = vrot.slane %v822, 5
  %v825 = vsel %vm628, %v820, %v824
  %v826 = vshrl.u32 %v763, 16
  %v828 = vrot.slane %v826, 4
  %v829 = vor.u32 %v828, %v824
  %v830 = vrot.slane %v829, 4
  %v832 = vshll.u32 %v764, 16
  %v834 = vrot.slane %v832, 5
  %v835 = vsel %vm628, %v830, %v834
  %v836 = vshrl.u32 %v764, 16
  %v838 = vrot.slane %v836, 4
  %v839 = vor.u32 %v838, %v834
  %v840 = vrot.slane %v839, 4
  %v842 = vshll.u32 %v765, 16
  %v844 = vrot.slane %v842, 5
  %v845 = vsel %vm628, %v840, %v844
  %v846 = vshrl.u32 %v765, 16
  %v848 = vrot.slane %v846, 4
  %v849 = vor.u32 %v848, %v844
  %v850 = vrot.slane %v849, 4
  %v852 = vshll.u32 %v767, 16
  %v854 = vrot.slane %v852, 5
  %v855 = vsel %vm628, %v850, %v854
  %v856 = vld [vmem:[#allocation3] sm:$0xe]
  %v857 = vld [vmem:[#allocation3 + $0x14] sm:$0xe]
  %v868 = vrot.slane %v856, 5
  %v869 = vrot.slane %v868, 4
  %v870 = vrot.slane %v759, 5
  %v871 = vsel %vm731, %v869, %v870
  %v872 = vrot.slane %v870, 4
  %v873 = vrot.slane %v760, 5
  %v874 = vsel %vm731, %v872, %v873
  %v875 = vrot.slane %v873, 4
  %v876 = vrot.slane %v761, 5
  %v877 = vsel %vm731, %v875, %v876
  %v878 = vrot.slane %v876, 4
  %v879 = vrot.slane %v766, 5
  %v880 = vsel %vm731, %v878, %v879
  %v881 = vrot.slane %v857, 5
  %v882 = vrot.slane %v881, 4
  %v883 = vrot.slane %v763, 5
  %v884 = vsel %vm731, %v882, %v883
  %v885 = vrot.slane %v883, 4
  %v886 = vrot.slane %v764, 5
  %v887 = vsel %vm731, %v885, %v886
  %v888 = vrot.slane %v886, 4
  %v889 = vrot.slane %v765, 5
  %v890 = vsel %vm731, %v888, %v889
  %v891 = vrot.slane %v889, 4
  %v892 = vrot.slane %v767, 5
  %v893 = vsel %vm731, %v891, %v892
  %v896 = vunpack.c.l.b16 %v616
  %v897 = vunpack.c.l.b16 %v617
  %v898 = vunpack.c.l.b16 %v618
  %v899 = vunpack.c.l.b16 %v619
  %v900 = vunpack.c.l.b16 %v620
  %v901 = vunpack.c.l.b16 %v621
  %v902 = vunpack.c.l.b16 %v622
  %v903 = vunpack.c.l.b16 %v623
  %v904 = vpack.c.b16 %v897, %v896
  %v905 = vpack.c.b16 %v899, %v898
  %v906 = vpack.c.b16 %v901, %v900
  %v907 = vpack.c.b16 %v903, %v902
  %v912 = vunpack.c.l.b16 %v642
  %v913 = vunpack.c.l.b16 %v652
  %v914 = vunpack.c.l.b16 %v662
  %v915 = vunpack.c.l.b16 %v672
  %v916 = vunpack.c.l.b16 %v686
  %v917 = vunpack.c.l.b16 %v696
  %v918 = vunpack.c.l.b16 %v706
  %v919 = vunpack.c.l.b16 %v716
  %v920 = vpack.c.b16 %v913, %v912
  %v921 = vpack.c.b16 %v915, %v914
  %v922 = vpack.c.b16 %v917, %v916
  %v923 = vpack.c.b16 %v919, %v918
  %v928 = vunpack.c.l.b16 %v735
  %v929 = vunpack.c.l.b16 %v738
  %v930 = vunpack.c.l.b16 %v741
  %v931 = vunpack.c.l.b16 %v744
  %v932 = vunpack.c.l.b16 %v748
  %v933 = vunpack.c.l.b16 %v751
  %v934 = vunpack.c.l.b16 %v754
  %v935 = vunpack.c.l.b16 %v757
  %v936 = vpack.c.b16 %v929, %v928
  %v937 = vpack.c.b16 %v931, %v930
  %v938 = vpack.c.b16 %v933, %v932
  %v939 = vpack.c.b16 %v935, %v934
  %v946 = vunpack.c.l.b16 %v758
  %v947 = vunpack.c.l.b16 %v759
  %v948 = vunpack.c.l.b16 %v760
  %v949 = vunpack.c.l.b16 %v761
  %v950 = vunpack.c.l.b16 %v762
  %v951 = vunpack.c.l.b16 %v763
  %v952 = vunpack.c.l.b16 %v764
  %v953 = vunpack.c.l.b16 %v765
  %v954 = vpack.c.b16 %v947, %v946
  %v955 = vpack.c.b16 %v949, %v948
  %v956 = vpack.c.b16 %v951, %v950
  %v957 = vpack.c.b16 %v953, %v952
  %v962 = vunpack.c.l.b16 %v781
  %v963 = vunpack.c.l.b16 %v791
  %v964 = vunpack.c.l.b16 %v801
  %v965 = vunpack.c.l.b16 %v811
  %v966 = vunpack.c.l.b16 %v825
  %v967 = vunpack.c.l.b16 %v835
  %v968 = vunpack.c.l.b16 %v845
  %v969 = vunpack.c.l.b16 %v855
  %v970 = vpack.c.b16 %v963, %v962
  %v971 = vpack.c.b16 %v965, %v964
  %v972 = vpack.c.b16 %v967, %v966
  %v973 = vpack.c.b16 %v969, %v968
  %v978 = vunpack.c.l.b16 %v871
  %v979 = vunpack.c.l.b16 %v874
  %v980 = vunpack.c.l.b16 %v877
  %v981 = vunpack.c.l.b16 %v880
  %v982 = vunpack.c.l.b16 %v884
  %v983 = vunpack.c.l.b16 %v887
  %v984 = vunpack.c.l.b16 %v890
  %v985 = vunpack.c.l.b16 %v893
  %v986 = vpack.c.b16 %v979, %v978
  %v987 = vpack.c.b16 %v981, %v980
  %v988 = vpack.c.b16 %v983, %v982
  %v989 = vpack.c.b16 %v985, %v984
  %v994 = vld [vmem:[%s6] sm:$0xf]
  %v995 = vld [vmem:[%s6 + $0x4] sm:$0xf]
  %v996 = vld [vmem:[%s6 + $0x8] sm:$0xf]
  %v997 = vld [vmem:[%s6 + $0xc] sm:$0xf]
  %v998 = vld [vmem:[%s6 + $0x10] sm:$0xf]
  %v999 = vld [vmem:[%s6 + $0x14] sm:$0xf]
  %v1000 = vld [vmem:[%s6 + $0x18] sm:$0xf]
  %v1001 = vld [vmem:[%s6 + $0x1c] sm:$0xf]
  %v1002 = vld [vmem:[%s6 + $0x20] sm:$0xf]
  %v1003 = vld [vmem:[%s6 + $0x24] sm:$0xf]
  %v1004 = vld [vmem:[%s6 + $0x28] sm:$0xf]
  %v1005 = vld [vmem:[%s6 + $0x2c] sm:$0xf]
  %v1006 = vld [vmem:[%s6 + $0x30] sm:$0xf]
  %v1007 = vld [vmem:[%s6 + $0x34] sm:$0xf]
  %v1008 = vld [vmem:[%s6 + $0x38] sm:$0xf]
  %v1009 = vld [vmem:[%s6 + $0x3c] sm:$0xf]
  %v1010 = vld [vmem:[%s6 + $0x40] sm:$0xf]
  %v1011 = vld [vmem:[%s6 + $0x44] sm:$0xf]
  %v1012 = vld [vmem:[%s6 + $0x48] sm:$0xf]
  %v1013 = vld [vmem:[%s6 + $0x4c] sm:$0xf]
  %v1014 = vld [vmem:[%s6 + $0x50] sm:$0xf]
  %v1015 = vld [vmem:[%s6 + $0x54] sm:$0xf]
  %v1016 = vld [vmem:[%s6 + $0x58] sm:$0xf]
  %v1017 = vld [vmem:[%s6 + $0x5c] sm:$0xf]
  %v1018 = vld [vmem:[%s6 + $0x60] sm:$0xf]
  %v1019 = vld [vmem:[%s6 + $0x64] sm:$0xf]
  %v1020 = vld [vmem:[%s6 + $0x68] sm:$0xf]
  %v1021 = vld [vmem:[%s6 + $0x6c] sm:$0xf]
  %v1022 = vld [vmem:[%s6 + $0x70] sm:$0xf]
  %v1023 = vld [vmem:[%s6 + $0x74] sm:$0xf]
  %v1024 = vld [vmem:[%s6 + $0x78] sm:$0xf]
  %v1025 = vld [vmem:[%s6 + $0x7c] sm:$0xf]
  %v1026 = vld [vmem:[%s6 + $0x80] sm:$0xf]
  %v1027 = vld [vmem:[%s6 + $0x84] sm:$0xf]
  %v1028 = vld [vmem:[%s6 + $0x88] sm:$0xf]
  %v1029 = vld [vmem:[%s6 + $0x8c] sm:$0xf]
  %v1030 = vld [vmem:[%s6 + $0x90] sm:$0xf]
  %v1031 = vld [vmem:[%s6 + $0x94] sm:$0xf]
  %v1032 = vld [vmem:[%s6 + $0x98] sm:$0xf]
  %v1033 = vld [vmem:[%s6 + $0x9c] sm:$0xf]
  %v1034 = vld [vmem:[%s6 + $0xa0] sm:$0xf]
  %v1035 = vld [vmem:[%s6 + $0xa4] sm:$0xf]
  %v1036 = vld [vmem:[%s6 + $0xa8] sm:$0xf]
  %v1037 = vld [vmem:[%s6 + $0xac] sm:$0xf]
  %v1038 = vld [vmem:[%s6 + $0xb0] sm:$0xf]
  %v1039 = vld [vmem:[%s6 + $0xb4] sm:$0xf]
  %v1040 = vld [vmem:[%s6 + $0xb8] sm:$0xf]
  %v1041 = vld [vmem:[%s6 + $0xbc] sm:$0xf]
  %v1042 = vld [vmem:[%s6 + $0xc0] sm:$0xf]
  %v1043 = vld [vmem:[%s6 + $0xc4] sm:$0xf]
  %v1044 = vld [vmem:[%s6 + $0xc8] sm:$0xf]
  %v1045 = vld [vmem:[%s6 + $0xcc] sm:$0xf]
  %v1046 = vld [vmem:[%s6 + $0xd0] sm:$0xf]
  %v1047 = vld [vmem:[%s6 + $0xd4] sm:$0xf]
  %v1048 = vld [vmem:[%s6 + $0xd8] sm:$0xf]
  %v1049 = vld [vmem:[%s6 + $0xdc] sm:$0xf]
  %v1050 = vld [vmem:[%s6 + $0xe0] sm:$0xf]
  %v1051 = vld [vmem:[%s6 + $0xe4] sm:$0xf]
  %v1052 = vld [vmem:[%s6 + $0xe8] sm:$0xf]
  %v1053 = vld [vmem:[%s6 + $0xec] sm:$0xf]
  %v1054 = vld [vmem:[%s6 + $0xf0] sm:$0xf]
  %v1055 = vld [vmem:[%s6 + $0xf4] sm:$0xf]
  %v1056 = vld [vmem:[%s6 + $0xf8] sm:$0xf]
  %v1057 = vld [vmem:[%s6 + $0xfc] sm:$0xf]
  %v1058 = vld [vmem:[%s6 + $0x100] sm:$0xf]
  %v1059 = vld [vmem:[%s6 + $0x104] sm:$0xf]
  %v1060 = vld [vmem:[%s6 + $0x108] sm:$0xf]
  %v1061 = vld [vmem:[%s6 + $0x10c] sm:$0xf]
  %v1062 = vld [vmem:[%s6 + $0x110] sm:$0xf]
  %v1063 = vld [vmem:[%s6 + $0x114] sm:$0xf]
  %v1064 = vld [vmem:[%s6 + $0x118] sm:$0xf]
  %v1065 = vld [vmem:[%s6 + $0x11c] sm:$0xf]
  %v1066 = vld [vmem:[%s6 + $0x120] sm:$0xf]
  %v1067 = vld [vmem:[%s6 + $0x124] sm:$0xf]
  %v1068 = vld [vmem:[%s6 + $0x128] sm:$0xf]
  %v1069 = vld [vmem:[%s6 + $0x12c] sm:$0xf]
  %v1070 = vld [vmem:[%s6 + $0x130] sm:$0xf]
  %v1071 = vld [vmem:[%s6 + $0x134] sm:$0xf]
  %v1072 = vld [vmem:[%s6 + $0x138] sm:$0xf]
  %v1073 = vld [vmem:[%s6 + $0x13c] sm:$0xf]
  %v1074 = vld [vmem:[%s6 + $0x140] sm:$0xf]
  %v1075 = vld [vmem:[%s6 + $0x144] sm:$0xf]
  %v1076 = vld [vmem:[%s6 + $0x148] sm:$0xf]
  %v1077 = vld [vmem:[%s6 + $0x14c] sm:$0xf]
  %v1078 = vld [vmem:[%s6 + $0x150] sm:$0xf]
  %v1079 = vld [vmem:[%s6 + $0x154] sm:$0xf]
  %v1080 = vld [vmem:[%s6 + $0x158] sm:$0xf]
  %v1081 = vld [vmem:[%s6 + $0x15c] sm:$0xf]
  %v1082 = vld [vmem:[%s6 + $0x160] sm:$0xf]
  %v1083 = vld [vmem:[%s6 + $0x164] sm:$0xf]
  %v1084 = vld [vmem:[%s6 + $0x168] sm:$0xf]
  %v1085 = vld [vmem:[%s6 + $0x16c] sm:$0xf]
  %v1086 = vld [vmem:[%s6 + $0x170] sm:$0xf]
  %v1087 = vld [vmem:[%s6 + $0x174] sm:$0xf]
  %v1088 = vld [vmem:[%s6 + $0x178] sm:$0xf]
  %v1089 = vld [vmem:[%s6 + $0x17c] sm:$0xf]
  %v1186 = vunpack.c.l.b16 %v994
  %v1187 = vunpack.c.l.b16 %v995
  %v1188 = vunpack.c.l.b16 %v996
  %v1189 = vunpack.c.l.b16 %v997
  %v1190 = vunpack.c.l.b16 %v998
  %v1191 = vunpack.c.l.b16 %v999
  %v1192 = vunpack.c.l.b16 %v1000
  %v1193 = vunpack.c.l.b16 %v1001
  %v1194 = vunpack.c.l.b16 %v1002
  %v1195 = vunpack.c.l.b16 %v1003
  %v1196 = vunpack.c.l.b16 %v1004
  %v1197 = vunpack.c.l.b16 %v1005
  %v1198 = vunpack.c.l.b16 %v1006
  %v1199 = vunpack.c.l.b16 %v1007
  %v1200 = vunpack.c.l.b16 %v1008
  %v1201 = vunpack.c.l.b16 %v1009
  %v1202 = vunpack.c.l.b16 %v1010
  %v1203 = vunpack.c.l.b16 %v1011
  %v1204 = vunpack.c.l.b16 %v1012
  %v1205 = vunpack.c.l.b16 %v1013
  %v1206 = vunpack.c.l.b16 %v1014
  %v1207 = vunpack.c.l.b16 %v1015
  %v1208 = vunpack.c.l.b16 %v1016
  %v1209 = vunpack.c.l.b16 %v1017
  %v1210 = vunpack.c.l.b16 %v1018
  %v1211 = vunpack.c.l.b16 %v1019
  %v1212 = vunpack.c.l.b16 %v1020
  %v1213 = vunpack.c.l.b16 %v1021
  %v1214 = vunpack.c.l.b16 %v1022
  %v1215 = vunpack.c.l.b16 %v1023
  %v1216 = vunpack.c.l.b16 %v1024
  %v1217 = vunpack.c.l.b16 %v1025
  %v1218 = vunpack.c.l.b16 %v1026
  %v1219 = vunpack.c.l.b16 %v1027
  %v1220 = vunpack.c.l.b16 %v1028
  %v1221 = vunpack.c.l.b16 %v1029
  %v1222 = vunpack.c.l.b16 %v1030
  %v1223 = vunpack.c.l.b16 %v1031
  %v1224 = vunpack.c.l.b16 %v1032
  %v1225 = vunpack.c.l.b16 %v1033
  %v1226 = vunpack.c.l.b16 %v1034
  %v1227 = vunpack.c.l.b16 %v1035
  %v1228 = vunpack.c.l.b16 %v1036
  %v1229 = vunpack.c.l.b16 %v1037
  %v1230 = vunpack.c.l.b16 %v1038
  %v1231 = vunpack.c.l.b16 %v1039
  %v1232 = vunpack.c.l.b16 %v1040
  %v1233 = vunpack.c.l.b16 %v1041
  %v1234 = vunpack.c.l.b16 %v1042
  %v1235 = vunpack.c.l.b16 %v1043
  %v1236 = vunpack.c.l.b16 %v1044
  %v1237 = vunpack.c.l.b16 %v1045
  %v1238 = vunpack.c.l.b16 %v1046
  %v1239 = vunpack.c.l.b16 %v1047
  %v1240 = vunpack.c.l.b16 %v1048
  %v1241 = vunpack.c.l.b16 %v1049
  %v1242 = vunpack.c.l.b16 %v1050
  %v1243 = vunpack.c.l.b16 %v1051
  %v1244 = vunpack.c.l.b16 %v1052
  %v1245 = vunpack.c.l.b16 %v1053
  %v1246 = vunpack.c.l.b16 %v1054
  %v1247 = vunpack.c.l.b16 %v1055
  %v1248 = vunpack.c.l.b16 %v1056
  %v1249 = vunpack.c.l.b16 %v1057
  %v1250 = vunpack.c.l.b16 %v1058
  %v1251 = vunpack.c.l.b16 %v1059
  %v1252 = vunpack.c.l.b16 %v1060
  %v1253 = vunpack.c.l.b16 %v1061
  %v1254 = vunpack.c.l.b16 %v1062
  %v1255 = vunpack.c.l.b16 %v1063
  %v1256 = vunpack.c.l.b16 %v1064
  %v1257 = vunpack.c.l.b16 %v1065
  %v1258 = vunpack.c.l.b16 %v1066
  %v1259 = vunpack.c.l.b16 %v1067
  %v1260 = vunpack.c.l.b16 %v1068
  %v1261 = vunpack.c.l.b16 %v1069
  %v1262 = vunpack.c.l.b16 %v1070
  %v1263 = vunpack.c.l.b16 %v1071
  %v1264 = vunpack.c.l.b16 %v1072
  %v1265 = vunpack.c.l.b16 %v1073
  %v1266 = vunpack.c.l.b16 %v1074
  %v1267 = vunpack.c.l.b16 %v1075
  %v1268 = vunpack.c.l.b16 %v1076
  %v1269 = vunpack.c.l.b16 %v1077
  %v1270 = vunpack.c.l.b16 %v1078
  %v1271 = vunpack.c.l.b16 %v1079
  %v1272 = vunpack.c.l.b16 %v1080
  %v1273 = vunpack.c.l.b16 %v1081
  %v1274 = vunpack.c.l.b16 %v1082
  %v1275 = vunpack.c.l.b16 %v1083
  %v1276 = vunpack.c.l.b16 %v1084
  %v1277 = vunpack.c.l.b16 %v1085
  %v1278 = vunpack.c.l.b16 %v1086
  %v1279 = vunpack.c.l.b16 %v1087
  %v1280 = vunpack.c.l.b16 %v1088
  %v1281 = vunpack.c.l.b16 %v1089
  %v1282 = vpack.c.b16 %v1187, %v1186
  %v1283 = vpack.c.b16 %v1189, %v1188
  %v1284 = vpack.c.b16 %v1191, %v1190
  %v1285 = vpack.c.b16 %v1193, %v1192
  %v1286 = vpack.c.b16 %v1195, %v1194
  %v1287 = vpack.c.b16 %v1197, %v1196
  %v1288 = vpack.c.b16 %v1199, %v1198
  %v1289 = vpack.c.b16 %v1201, %v1200
  %v1290 = vpack.c.b16 %v1203, %v1202
  %v1291 = vpack.c.b16 %v1205, %v1204
  %v1292 = vpack.c.b16 %v1207, %v1206
  %v1293 = vpack.c.b16 %v1209, %v1208
  %v1294 = vpack.c.b16 %v1211, %v1210
  %v1295 = vpack.c.b16 %v1213, %v1212
  %v1296 = vpack.c.b16 %v1215, %v1214
  %v1297 = vpack.c.b16 %v1217, %v1216
  %v1298 = vpack.c.b16 %v1219, %v1218
  %v1299 = vpack.c.b16 %v1221, %v1220
  %v1300 = vpack.c.b16 %v1223, %v1222
  %v1301 = vpack.c.b16 %v1225, %v1224
  %v1302 = vpack.c.b16 %v1227, %v1226
  %v1303 = vpack.c.b16 %v1229, %v1228
  %v1304 = vpack.c.b16 %v1231, %v1230
  %v1305 = vpack.c.b16 %v1233, %v1232
  %v1306 = vpack.c.b16 %v1235, %v1234
  %v1307 = vpack.c.b16 %v1237, %v1236
  %v1308 = vpack.c.b16 %v1239, %v1238
  %v1309 = vpack.c.b16 %v1241, %v1240
  %v1310 = vpack.c.b16 %v1243, %v1242
  %v1311 = vpack.c.b16 %v1245, %v1244
  %v1312 = vpack.c.b16 %v1247, %v1246
  %v1313 = vpack.c.b16 %v1249, %v1248
  %v1314 = vpack.c.b16 %v1251, %v1250
  %v1315 = vpack.c.b16 %v1253, %v1252
  %v1316 = vpack.c.b16 %v1255, %v1254
  %v1317 = vpack.c.b16 %v1257, %v1256
  %v1318 = vpack.c.b16 %v1259, %v1258
  %v1319 = vpack.c.b16 %v1261, %v1260
  %v1320 = vpack.c.b16 %v1263, %v1262
  %v1321 = vpack.c.b16 %v1265, %v1264
  %v1322 = vpack.c.b16 %v1267, %v1266
  %v1323 = vpack.c.b16 %v1269, %v1268
  %v1324 = vpack.c.b16 %v1271, %v1270
  %v1325 = vpack.c.b16 %v1273, %v1272
  %v1326 = vpack.c.b16 %v1275, %v1274
  %v1327 = vpack.c.b16 %v1277, %v1276
  %v1328 = vpack.c.b16 %v1279, %v1278
  %v1329 = vpack.c.b16 %v1281, %v1280
  %1378 = vmatpush.bf16.msra.mxu0 %v1289
  %1379 = vmatpush.bf16.msra.mxu0 %v1288
  %1380 = vmatpush.bf16.msra.mxu0 %v1287
  %1381 = vmatpush.bf16.msra.mxu0 %v1286
  %1382 = vmatpush.bf16.msra.mxu0 %v1285
  %1383 = vmatpush.bf16.msra.mxu0 %v1284
  %1384 = vmatpush.bf16.msra.mxu0 %v1283
  %1385 = vmatpush.bf16.msra.mxu0 %v1282
  %1386 = vmatmul.bf16.gmra.mxu0 %v904
  %v1387 = vpop.f32.mrf.mxu0
  %v1388 = vadd.f32 0.0, %v1387
  %v1389 = vpop.f32.mrf.mxu0
  %v1390 = vadd.f32 0.0, %v1389
  %1391 = vmatmul.bf16.gmra.mxu0 %v905
  %v1392 = vpop.f32.mrf.mxu0
  %v1393 = vadd.f32 0.0, %v1392
  %v1394 = vpop.f32.mrf.mxu0
  %v1395 = vadd.f32 0.0, %v1394
  %1396 = vmatmul.bf16.gmra.mxu0 %v906
  %v1397 = vpop.f32.mrf.mxu0
  %v1398 = vadd.f32 0.0, %v1397
  %v1399 = vpop.f32.mrf.mxu0
  %v1400 = vadd.f32 0.0, %v1399
  %1401 = vmatmul.bf16.gmra.mxu0 %v907
  %v1402 = vpop.f32.mrf.mxu0
  %v1403 = vadd.f32 0.0, %v1402
  %v1404 = vpop.f32.mrf.mxu0
  %v1405 = vadd.f32 0.0, %v1404
  %1406 = vdwg.mxu0
  %1407 = vmatpush.bf16.msra.mxu0 %v1297
  %1408 = vmatpush.bf16.msra.mxu0 %v1296
  %1409 = vmatpush.bf16.msra.mxu0 %v1295
  %1410 = vmatpush.bf16.msra.mxu0 %v1294
  %1411 = vmatpush.bf16.msra.mxu0 %v1293
  %1412 = vmatpush.bf16.msra.mxu0 %v1292
  %1413 = vmatpush.bf16.msra.mxu0 %v1291
  %1414 = vmatpush.bf16.msra.mxu0 %v1290
  %1415 = vmatmul.bf16.gmra.mxu0 %v920
  %v1416 = vpop.f32.mrf.mxu0
  %v1417 = vadd.f32 %v1388, %v1416
  %v1418 = vpop.f32.mrf.mxu0
  %v1419 = vadd.f32 %v1390, %v1418
  %1420 = vmatmul.bf16.gmra.mxu0 %v921
  %v1421 = vpop.f32.mrf.mxu0
  %v1422 = vadd.f32 %v1393, %v1421
  %v1423 = vpop.f32.mrf.mxu0
  %v1424 = vadd.f32 %v1395, %v1423
  %1425 = vmatmul.bf16.gmra.mxu0 %v922
  %v1426 = vpop.f32.mrf.mxu0
  %v1427 = vadd.f32 %v1398, %v1426
  %v1428 = vpop.f32.mrf.mxu0
  %v1429 = vadd.f32 %v1400, %v1428
  %1430 = vmatmul.bf16.gmra.mxu0 %v923
  %v1431 = vpop.f32.mrf.mxu0
  %v1432 = vadd.f32 %v1403, %v1431
  %v1433 = vpop.f32.mrf.mxu0
  %v1434 = vadd.f32 %v1405, %v1433
  %1435 = vdwg.mxu0
  %1436 = vmatpush.bf16.msra.mxu0 %v1305
  %1437 = vmatpush.bf16.msra.mxu0 %v1304
  %1438 = vmatpush.bf16.msra.mxu0 %v1303
  %1439 = vmatpush.bf16.msra.mxu0 %v1302
  %1440 = vmatpush.bf16.msra.mxu0 %v1301
  %1441 = vmatpush.bf16.msra.mxu0 %v1300
  %1442 = vmatpush.bf16.msra.mxu0 %v1299
  %1443 = vmatpush.bf16.msra.mxu0 %v1298
  %1444 = vmatmul.bf16.gmra.mxu0 %v936
  %v1445 = vpop.f32.mrf.mxu0
  %v1446 = vadd.f32 %v1417, %v1445
  %v1447 = vpop.f32.mrf.mxu0
  %v1448 = vadd.f32 %v1419, %v1447
  %1449 = vmatmul.bf16.gmra.mxu0 %v937
  %v1450 = vpop.f32.mrf.mxu0
  %v1451 = vadd.f32 %v1422, %v1450
  %v1452 = vpop.f32.mrf.mxu0
  %v1453 = vadd.f32 %v1424, %v1452
  %1454 = vmatmul.bf16.gmra.mxu0 %v938
  %v1455 = vpop.f32.mrf.mxu0
  %v1456 = vadd.f32 %v1427, %v1455
  %v1457 = vpop.f32.mrf.mxu0
  %v1458 = vadd.f32 %v1429, %v1457
  %1459 = vmatmul.bf16.gmra.mxu0 %v939
  %v1460 = vpop.f32.mrf.mxu0
  %v1461 = vadd.f32 %v1432, %v1460
  %v1462 = vpop.f32.mrf.mxu0
  %v1463 = vadd.f32 %v1434, %v1462
  %1464 = vdwg.mxu0
  %1465 = vmatpush.bf16.msra.mxu0 %v1313
  %1466 = vmatpush.bf16.msra.mxu0 %v1312
  %1467 = vmatpush.bf16.msra.mxu0 %v1311
  %1468 = vmatpush.bf16.msra.mxu0 %v1310
  %1469 = vmatpush.bf16.msra.mxu0 %v1309
  %1470 = vmatpush.bf16.msra.mxu0 %v1308
  %1471 = vmatpush.bf16.msra.mxu0 %v1307
  %1472 = vmatpush.bf16.msra.mxu0 %v1306
  %1473 = vmatmul.bf16.gmra.mxu0 %v954
  %v1474 = vpop.f32.mrf.mxu0
  %v1475 = vadd.f32 %v1446, %v1474
  %v1476 = vpop.f32.mrf.mxu0
  %v1477 = vadd.f32 %v1448, %v1476
  %1478 = vmatmul.bf16.gmra.mxu0 %v955
  %v1479 = vpop.f32.mrf.mxu0
  %v1480 = vadd.f32 %v1451, %v1479
  %v1481 = vpop.f32.mrf.mxu0
  %v1482 = vadd.f32 %v1453, %v1481
  %1483 = vmatmul.bf16.gmra.mxu0 %v956
  %v1484 = vpop.f32.mrf.mxu0
  %v1485 = vadd.f32 %v1456, %v1484
  %v1486 = vpop.f32.mrf.mxu0
  %v1487 = vadd.f32 %v1458, %v1486
  %1488 = vmatmul.bf16.gmra.mxu0 %v957
  %v1489 = vpop.f32.mrf.mxu0
  %v1490 = vadd.f32 %v1461, %v1489
  %v1491 = vpop.f32.mrf.mxu0
  %v1492 = vadd.f32 %v1463, %v1491
  %1493 = vdwg.mxu0
  %1494 = vmatpush.bf16.msra.mxu0 %v1321
  %1495 = vmatpush.bf16.msra.mxu0 %v1320
  %1496 = vmatpush.bf16.msra.mxu0 %v1319
  %1497 = vmatpush.bf16.msra.mxu0 %v1318
  %1498 = vmatpush.bf16.msra.mxu0 %v1317
  %1499 = vmatpush.bf16.msra.mxu0 %v1316
  %1500 = vmatpush.bf16.msra.mxu0 %v1315
  %1501 = vmatpush.bf16.msra.mxu0 %v1314
  %1502 = vmatmul.bf16.gmra.mxu0 %v970
  %v1503 = vpop.f32.mrf.mxu0
  %v1504 = vadd.f32 %v1475, %v1503
  %v1505 = vpop.f32.mrf.mxu0
  %v1506 = vadd.f32 %v1477, %v1505
  %1507 = vmatmul.bf16.gmra.mxu0 %v971
  %v1508 = vpop.f32.mrf.mxu0
  %v1509 = vadd.f32 %v1480, %v1508
  %v1510 = vpop.f32.mrf.mxu0
  %v1511 = vadd.f32 %v1482, %v1510
  %1512 = vmatmul.bf16.gmra.mxu0 %v972
  %v1513 = vpop.f32.mrf.mxu0
  %v1514 = vadd.f32 %v1485, %v1513
  %v1515 = vpop.f32.mrf.mxu0
  %v1516 = vadd.f32 %v1487, %v1515
  %1517 = vmatmul.bf16.gmra.mxu0 %v973
  %v1518 = vpop.f32.mrf.mxu0
  %v1519 = vadd.f32 %v1490, %v1518
  %v1520 = vpop.f32.mrf.mxu0
  %v1521 = vadd.f32 %v1492, %v1520
  %1522 = vdwg.mxu0
  %1523 = vmatpush.bf16.msra.mxu0 %v1329
  %1524 = vmatpush.bf16.msra.mxu0 %v1328
  %1525 = vmatpush.bf16.msra.mxu0 %v1327
  %1526 = vmatpush.bf16.msra.mxu0 %v1326
  %1527 = vmatpush.bf16.msra.mxu0 %v1325
  %1528 = vmatpush.bf16.msra.mxu0 %v1324
  %1529 = vmatpush.bf16.msra.mxu0 %v1323
  %1530 = vmatpush.bf16.msra.mxu0 %v1322
  %1531 = vmatmul.bf16.gmra.mxu0 %v986
  %v1532 = vpop.f32.mrf.mxu0
  %v1533 = vadd.f32 %v1504, %v1532
  %v1534 = vpop.f32.mrf.mxu0
  %v1535 = vadd.f32 %v1506, %v1534
  %1536 = vmatmul.bf16.gmra.mxu0 %v987
  %v1537 = vpop.f32.mrf.mxu0
  %v1538 = vadd.f32 %v1509, %v1537
  %v1539 = vpop.f32.mrf.mxu0
  %v1540 = vadd.f32 %v1511, %v1539
  %1541 = vmatmul.bf16.gmra.mxu0 %v988
  %v1542 = vpop.f32.mrf.mxu0
  %v1543 = vadd.f32 %v1514, %v1542
  %v1544 = vpop.f32.mrf.mxu0
  %v1545 = vadd.f32 %v1516, %v1544
  %1546 = vmatmul.bf16.gmra.mxu0 %v989
  %v1547 = vpop.f32.mrf.mxu0
  %v1548 = vadd.f32 %v1519, %v1547
  %v1549 = vpop.f32.mrf.mxu0
  %v1550 = vadd.f32 %v1521, %v1549
  %1551 = vdwg.mxu0
  %v1552 = vadd.f32 %v1533, %v1535
  %v1553 = vadd.f32 %v1552, %v1538
  %v1554 = vadd.f32 %v1553, %v1540
  %v1555 = vadd.f32 %v1554, %v1543
  %v1556 = vadd.f32 %v1555, %v1545
  %v1557 = vadd.f32 %v1556, %v1548
  %v1558 = vadd.f32 %v1557, %v1550
  %v1559 = vrot.slane %v1558, 4
  %v1560 = vadd.f32 %v1558, %v1559
  %v1561 = vrot.slane %v1560, 2
  %v1562 = vadd.f32 %v1560, %v1561
  %v1563 = vrot.slane %v1562, 1
  %v1564 = vadd.f32 %v1562, %v1563
  %v1565 = vmul.f32 %v1533, %v1533
  %v1566 = vmul.f32 %v1535, %v1535
  %v1567 = vmul.f32 %v1538, %v1538
  %v1568 = vmul.f32 %v1540, %v1540
  %v1569 = vmul.f32 %v1543, %v1543
  %v1570 = vmul.f32 %v1545, %v1545
  %v1571 = vmul.f32 %v1548, %v1548
  %v1572 = vmul.f32 %v1550, %v1550
  %v1573 = vadd.f32 %v1565, %v1566
  %v1574 = vadd.f32 %v1573, %v1567
  %v1575 = vadd.f32 %v1574, %v1568
  %v1576 = vadd.f32 %v1575, %v1569
  %v1577 = vadd.f32 %v1576, %v1570
  %v1578 = vadd.f32 %v1577, %v1571
  %v1579 = vadd.f32 %v1578, %v1572
  %v1580 = vrot.slane %v1579, 4
  %v1581 = vadd.f32 %v1579, %v1580
  %v1582 = vrot.slane %v1581, 2
  %v1583 = vadd.f32 %v1581, %v1582
  %v1584 = vrot.slane %v1583, 1
  %v1585 = vadd.f32 %v1583, %v1584
  %vm1586 = vcmask 1040384
  %v1587 = vsel %vm1586, %v1564, %v1585
  %v1588 = vld [vmem:[%s12] sm:$0xff]
  %v1589 = vld [vmem:[%s12 + $0x8] sm:$0xff]
  %v1590 = vld [vmem:[%s12 + $0x10] sm:$0xff]
  %v1591 = vld [vmem:[%s12 + $0x18] sm:$0xff]
  %v1592 = vld [vmem:[%s12 + $0x20] sm:$0xff]
  %v1593 = vld [vmem:[%s12 + $0x28] sm:$0xff]
  %v1594 = vld [vmem:[%s12 + $0x30] sm:$0xff]
  %v1595 = vld [vmem:[%s12 + $0x38] sm:$0xff]
  %v1596 = vld [vmem:[%s12 + $0x40] sm:$0xff]
  %v1597 = vld [vmem:[%s12 + $0x48] sm:$0xff]
  %v1598 = vld [vmem:[%s12 + $0x50] sm:$0xff]
  %v1599 = vld [vmem:[%s12 + $0x58] sm:$0xff]
  %v1600 = vld [vmem:[%s12 + $0x60] sm:$0xff]
  %v1601 = vld [vmem:[%s12 + $0x68] sm:$0xff]
  %v1602 = vld [vmem:[%s12 + $0x70] sm:$0xff]
  %v1603 = vld [vmem:[%s12 + $0x78] sm:$0xff]
  %1604 = vmatpush.msra.mxu0 %v1603
  %1605 = vmatpush.msra.mxu0 %v1602
  %1606 = vmatpush.msra.mxu0 %v1601
  %1607 = vmatpush.msra.mxu0 %v1600
  %1608 = vmatpush.msra.mxu0 %v1599
  %1609 = vmatpush.msra.mxu0 %v1598
  %1610 = vmatpush.msra.mxu0 %v1597
  %1611 = vmatpush.msra.mxu0 %v1596
  %1612 = vmatpush.msra.mxu0 %v1595
  %1613 = vmatpush.msra.mxu0 %v1594
  %1614 = vmatpush.msra.mxu0 %v1593
  %1615 = vmatpush.msra.mxu0 %v1592
  %1616 = vmatpush.msra.mxu0 %v1591
  %1617 = vmatpush.msra.mxu0 %v1590
  %1618 = vmatpush.msra.mxu0 %v1589
  %1619 = vmatpush.msra.mxu0 %v1588
  %1620 = vmatmul.f32.gmra.mxu0 %v1587
  %v1621 = vpop.f32.mrf.mxu0
  %v1622 = vadd.f32 0.0, %v1621
  %1623 = vdwg.mxu0
  %v1624 = vmul.f32 %v1622, 0.00048828125
  %v1625 = vmul.f32 %v1624, %v1624
  %v1627 = vrot.slane %v1625, 7
  %v1629 = vsub.f32 %v1624, %v1627
  %v1630 = vmax.f32 %v1629, 0.0
  %v1631 = vld [vmem:[%s8] sm:$0x1]
  %v1632 = vadd.f32 %v1630, 1e-05
  %v1633 = vrsqrt.pop %v1632
  %v1634 = vmul.f32 %v1633, %v1632
  %v1635 = vmul.f32 %v1634, %v1633
  %v1636 = vmul.f32 0.5, %v1635
  %v1637 = vsub.f32 1.5, %v1636
  %v1638 = vmul.f32 %v1633, %v1637
  %vm1639 = vweird.f32 %v1632
  %vm1640 = vweird.f32 %v1633
  %vm1641 = vmor %vm1639, %vm1640
  %v1642 = vsel %vm1641, %v1633, %v1638
  %1644 = vst [vmem:[#allocation1] sm:$0xff] %v1642
  %s1645 = scalar_lea.vmem [#allocation1], 1
  %v1646 = vld [vmem:[%s1645] ss:$9 sm:$0xff]
  %v1648 = vmul.f32 %v1631, %v1646
  %v1649 = vld [vmem:[%s9] sm:$0x1]
  %v1650 = vmul.f32 %v1624, %v1648
  %v1651 = vsub.f32 %v1649, %v1650
  %v1653 = vperm.slane %v1651, 0
  %v1655 = vsel %vm1586, %v1648, %v1653
  %v1656 = vld [vmem:[%s13] sm:$0xf]
  %vm1657 = vcmask 31744
  %v1659 = vsel %vm1657, %v1655, 0
  %vm1661 = vcmask 1043456
  %v1663 = vsel %vm1661, %v1656, 0
  %1665 = vmatpush.msra.mxu0 0.0
  %1666 = vmatpush.msra.mxu0 0.0
  %1667 = vmatpush.msra.mxu0 0.0
  %1668 = vmatpush.msra.mxu0 0.0
  %1669 = vmatpush.msra.mxu0 0.0
  %1670 = vmatpush.msra.mxu0 0.0
  %1671 = vmatpush.msra.mxu0 0.0
  %1672 = vmatpush.msra.mxu0 0.0
  %1673 = vmatpush.msra.mxu0 0.0
  %1674 = vmatpush.msra.mxu0 0.0
  %1675 = vmatpush.msra.mxu0 0.0
  %1676 = vmatpush.msra.mxu0 0.0
  %1677 = vmatpush.msra.mxu0 0.0
  %1678 = vmatpush.msra.mxu0 0.0
  %1679 = vmatpush.msra.mxu0 0.0
  %1680 = vmatpush.msra.mxu0 %v1663
  %1681 = vmatmul.f32.gmra.mxu0 %v1659
  %v1682 = vpop.f32.mrf.mxu0
  %v1683 = vadd.f32 0.0, %v1682
  %1684 = vdwg.mxu0
  %v1685 = vperm.slane %v1683, 0
  %v1686 = vmul.f32 %v1533, %v1685
  %v1687 = vmul.f32 %v1535, %v1685
  %v1688 = vmul.f32 %v1538, %v1685
  %v1689 = vmul.f32 %v1540, %v1685
  %v1690 = vmul.f32 %v1543, %v1685
  %v1691 = vmul.f32 %v1545, %v1685
  %v1692 = vmul.f32 %v1548, %v1685
  %v1693 = vmul.f32 %v1550, %v1685
  %v1694 = vperm.slane %v1683, 1
  %v1695 = vadd.f32 %v1686, %v1694
  %v1696 = vadd.f32 %v1687, %v1694
  %v1697 = vadd.f32 %v1688, %v1694
  %v1698 = vadd.f32 %v1689, %v1694
  %v1699 = vadd.f32 %v1690, %v1694
  %v1700 = vadd.f32 %v1691, %v1694
  %v1701 = vadd.f32 %v1692, %v1694
  %v1702 = vadd.f32 %v1693, %v1694
  %v1703 = vmax.f32 %v1695, 0.0
  %v1704 = vmax.f32 %v1696, 0.0
  %v1705 = vmax.f32 %v1697, 0.0
  %v1706 = vmax.f32 %v1698, 0.0
  %v1707 = vmax.f32 %v1699, 0.0
  %v1708 = vmax.f32 %v1700, 0.0
  %v1709 = vmax.f32 %v1701, 0.0
  %v1710 = vmax.f32 %v1702, 0.0
  %v1711 = vpack.c.bf16 %v1703, %v1703
  %v1712 = vpack.c.bf16 %v1704, %v1704
  %v1713 = vpack.c.bf16 %v1705, %v1705
  %v1714 = vpack.c.bf16 %v1706, %v1706
  %v1715 = vpack.c.bf16 %v1707, %v1707
  %v1716 = vpack.c.bf16 %v1708, %v1708
  %v1717 = vpack.c.bf16 %v1709, %v1709
  %v1718 = vpack.c.bf16 %v1710, %v1710
  %v1720 = vshrl.u32 %v1711, 16
  %v1722 = vrot.slane %v1720, 7
  %v1723 = vshll.u32 %v1711, 16
  %v1725 = vor.u32 %v1722, %v1723
  %v1726 = vrot.slane %v1722, 4
  %v1728 = vshrl.u32 %v1712, 16
  %v1730 = vrot.slane %v1728, 7
  %v1731 = vshll.u32 %v1712, 16
  %v1733 = vor.u32 %v1730, %v1731
  %v1734 = vsel %vm409, %v1726, %v1733
  %v1735 = vrot.slane %v1730, 4
  %v1737 = vshrl.u32 %v1713, 16
  %v1739 = vrot.slane %v1737, 7
  %v1740 = vshll.u32 %v1713, 16
  %v1742 = vor.u32 %v1739, %v1740
  %v1743 = vsel %vm409, %v1735, %v1742
  %v1744 = vrot.slane %v1739, 4
  %v1746 = vshrl.u32 %v1714, 16
  %v1748 = vrot.slane %v1746, 7
  %v1749 = vshll.u32 %v1714, 16
  %v1751 = vor.u32 %v1748, %v1749
  %v1752 = vsel %vm409, %v1744, %v1751
  %v1753 = vrot.slane %v1748, 4
  %v1755 = vshrl.u32 %v1715, 16
  %v1757 = vrot.slane %v1755, 7
  %v1758 = vshll.u32 %v1715, 16
  %v1760 = vor.u32 %v1757, %v1758
  %v1761 = vrot.slane %v1757, 4
  %v1763 = vshrl.u32 %v1716, 16
  %v1765 = vrot.slane %v1763, 7
  %v1766 = vshll.u32 %v1716, 16
  %v1768 = vor.u32 %v1765, %v1766
  %v1769 = vsel %vm409, %v1761, %v1768
  %v1770 = vrot.slane %v1765, 4
  %v1772 = vshrl.u32 %v1717, 16
  %v1774 = vrot.slane %v1772, 7
  %v1775 = vshll.u32 %v1717, 16
  %v1777 = vor.u32 %v1774, %v1775
  %v1778 = vsel %vm409, %v1770, %v1777
  %v1779 = vrot.slane %v1774, 4
  %v1781 = vshrl.u32 %v1718, 16
  %v1783 = vrot.slane %v1781, 7
  %v1784 = vshll.u32 %v1718, 16
  %v1786 = vor.u32 %v1783, %v1784
  %v1787 = vsel %vm409, %v1779, %v1786
  %v1788 = vrot.slane %v1783, 4
  %v1799 = vld [vmem:[#allocation2] sm:$0xf]
  %v1800 = vsel %vm491, %v1725, %v1799
  %1801 = vst [vmem:[#allocation2] sm:$0xf] %v1800
  %1802 = vst [vmem:[#allocation2 + $0x4] sm:$0xf] %v1734
  %1803 = vst [vmem:[#allocation2 + $0x8] sm:$0xf] %v1743
  %1804 = vst [vmem:[#allocation2 + $0xc] sm:$0xf] %v1752
  %v1805 = vld [vmem:[#allocation2 + $0x10] sm:$0x1]
  %v1806 = vsel %vm365, %v1753, %v1805
  %1807 = vst [vmem:[#allocation2 + $0x10] sm:$0x1] %v1806
  %v1808 = vld [vmem:[#allocation2 + $0x14] sm:$0xf]
  %v1809 = vsel %vm491, %v1760, %v1808
  %1810 = vst [vmem:[#allocation2 + $0x14] sm:$0xf] %v1809
  %1811 = vst [vmem:[#allocation2 + $0x18] sm:$0xf] %v1769
  %1812 = vst [vmem:[#allocation2 + $0x1c] sm:$0xf] %v1778
  %1813 = vst [vmem:[#allocation2 + $0x20] sm:$0xf] %v1787
  %v1814 = vld [vmem:[#allocation2 + $0x24] sm:$0x1]
  %v1815 = vsel %vm365, %v1788, %v1814
  %1816 = vst [vmem:[#allocation2 + $0x24] sm:$0x1] %v1815
  %v1817 = vld [vmem:[#allocation2] sm:$0xf]
  %v1818 = vld [vmem:[#allocation2 + $0x4] sm:$0xf]
  %v1819 = vld [vmem:[#allocation2 + $0x8] sm:$0xf]
  %v1820 = vld [vmem:[#allocation2 + $0xc] sm:$0xf]
  %v1821 = vld [vmem:[#allocation2 + $0x14] sm:$0xf]
  %v1822 = vld [vmem:[#allocation2 + $0x18] sm:$0xf]
  %v1823 = vld [vmem:[#allocation2 + $0x1c] sm:$0xf]
  %v1824 = vld [vmem:[#allocation2 + $0x20] sm:$0xf]
  %v1825 = vld [vmem:[#allocation2 + $0x10] sm:$0x1]
  %v1826 = vld [vmem:[#allocation2 + $0x24] sm:$0x1]
  %v1828 = vshrl.u32 %v1817, 16
  %v1830 = vrot.slane %v1828, 4
  %v1831 = vshll.u32 %v1817, 16
  %v1833 = vrot.slane %v1831, 5
  %v1834 = vor.u32 %v1830, %v1833
  %v1835 = vrot.slane %v1834, 4
  %v1837 = vshll.u32 %v1818, 16
  %v1839 = vrot.slane %v1837, 5
  %v1840 = vsel %vm628, %v1835, %v1839
  %v1841 = vshrl.u32 %v1818, 16
  %v1843 = vrot.slane %v1841, 4
  %v1844 = vor.u32 %v1843, %v1839
  %v1845 = vrot.slane %v1844, 4
  %v1847 = vshll.u32 %v1819, 16
  %v1849 = vrot.slane %v1847, 5
  %v1850 = vsel %vm628, %v1845, %v1849
  %v1851 = vshrl.u32 %v1819, 16
  %v1853 = vrot.slane %v1851, 4
  %v1854 = vor.u32 %v1853, %v1849
  %v1855 = vrot.slane %v1854, 4
  %v1857 = vshll.u32 %v1820, 16
  %v1859 = vrot.slane %v1857, 5
  %v1860 = vsel %vm628, %v1855, %v1859
  %v1861 = vshrl.u32 %v1820, 16
  %v1863 = vrot.slane %v1861, 4
  %v1864 = vor.u32 %v1863, %v1859
  %v1865 = vrot.slane %v1864, 4
  %v1867 = vshll.u32 %v1825, 16
  %v1869 = vrot.slane %v1867, 5
  %v1870 = vsel %vm628, %v1865, %v1869
  %v1872 = vshrl.u32 %v1821, 16
  %v1874 = vrot.slane %v1872, 4
  %v1875 = vshll.u32 %v1821, 16
  %v1877 = vrot.slane %v1875, 5
  %v1878 = vor.u32 %v1874, %v1877
  %v1879 = vrot.slane %v1878, 4
  %v1881 = vshll.u32 %v1822, 16
  %v1883 = vrot.slane %v1881, 5
  %v1884 = vsel %vm628, %v1879, %v1883
  %v1885 = vshrl.u32 %v1822, 16
  %v1887 = vrot.slane %v1885, 4
  %v1888 = vor.u32 %v1887, %v1883
  %v1889 = vrot.slane %v1888, 4
  %v1891 = vshll.u32 %v1823, 16
  %v1893 = vrot.slane %v1891, 5
  %v1894 = vsel %vm628, %v1889, %v1893
  %v1895 = vshrl.u32 %v1823, 16
  %v1897 = vrot.slane %v1895, 4
  %v1898 = vor.u32 %v1897, %v1893
  %v1899 = vrot.slane %v1898, 4
  %v1901 = vshll.u32 %v1824, 16
  %v1903 = vrot.slane %v1901, 5
  %v1904 = vsel %vm628, %v1899, %v1903
  %v1905 = vshrl.u32 %v1824, 16
  %v1907 = vrot.slane %v1905, 4
  %v1908 = vor.u32 %v1907, %v1903
  %v1909 = vrot.slane %v1908, 4
  %v1911 = vshll.u32 %v1826, 16
  %v1913 = vrot.slane %v1911, 5
  %v1914 = vsel %vm628, %v1909, %v1913
  %v1915 = vld [vmem:[#allocation2] sm:$0xe]
  %v1916 = vld [vmem:[#allocation2 + $0x14] sm:$0xe]
  %v1927 = vrot.slane %v1915, 5
  %v1928 = vrot.slane %v1927, 4
  %v1929 = vrot.slane %v1818, 5
  %v1930 = vsel %vm731, %v1928, %v1929
  %v1931 = vrot.slane %v1929, 4
  %v1932 = vrot.slane %v1819, 5
  %v1933 = vsel %vm731, %v1931, %v1932
  %v1934 = vrot.slane %v1932, 4
  %v1935 = vrot.slane %v1820, 5
  %v1936 = vsel %vm731, %v1934, %v1935
  %v1937 = vrot.slane %v1935, 4
  %v1938 = vrot.slane %v1825, 5
  %v1939 = vsel %vm731, %v1937, %v1938
  %v1940 = vrot.slane %v1916, 5
  %v1941 = vrot.slane %v1940, 4
  %v1942 = vrot.slane %v1822, 5
  %v1943 = vsel %vm731, %v1941, %v1942
  %v1944 = vrot.slane %v1942, 4
  %v1945 = vrot.slane %v1823, 5
  %v1946 = vsel %vm731, %v1944, %v1945
  %v1947 = vrot.slane %v1945, 4
  %v1948 = vrot.slane %v1824, 5
  %v1949 = vsel %vm731, %v1947, %v1948
  %v1950 = vrot.slane %v1948, 4
  %v1951 = vrot.slane %v1826, 5
  %v1952 = vsel %vm731, %v1950, %v1951
  %v1955 = vunpack.c.l.b16 %v1817
  %v1956 = vunpack.c.l.b16 %v1818
  %v1957 = vunpack.c.l.b16 %v1819
  %v1958 = vunpack.c.l.b16 %v1820
  %v1959 = vunpack.c.l.b16 %v1821
  %v1960 = vunpack.c.l.b16 %v1822
  %v1961 = vunpack.c.l.b16 %v1823
  %v1962 = vunpack.c.l.b16 %v1824
  %v1963 = vpack.c.b16 %v1956, %v1955
  %v1964 = vpack.c.b16 %v1958, %v1957
  %v1965 = vpack.c.b16 %v1960, %v1959
  %v1966 = vpack.c.b16 %v1962, %v1961
  %v1971 = vunpack.c.l.b16 %v1840
  %v1972 = vunpack.c.l.b16 %v1850
  %v1973 = vunpack.c.l.b16 %v1860
  %v1974 = vunpack.c.l.b16 %v1870
  %v1975 = vunpack.c.l.b16 %v1884
  %v1976 = vunpack.c.l.b16 %v1894
  %v1977 = vunpack.c.l.b16 %v1904
  %v1978 = vunpack.c.l.b16 %v1914
  %v1979 = vpack.c.b16 %v1972, %v1971
  %v1980 = vpack.c.b16 %v1974, %v1973
  %v1981 = vpack.c.b16 %v1976, %v1975
  %v1982 = vpack.c.b16 %v1978, %v1977
  %v1987 = vunpack.c.l.b16 %v1930
  %v1988 = vunpack.c.l.b16 %v1933
  %v1989 = vunpack.c.l.b16 %v1936
  %v1990 = vunpack.c.l.b16 %v1939
  %v1991 = vunpack.c.l.b16 %v1943
  %v1992 = vunpack.c.l.b16 %v1946
  %v1993 = vunpack.c.l.b16 %v1949
  %v1994 = vunpack.c.l.b16 %v1952
  %v1995 = vpack.c.b16 %v1988, %v1987
  %v1996 = vpack.c.b16 %v1990, %v1989
  %v1997 = vpack.c.b16 %v1992, %v1991
  %v1998 = vpack.c.b16 %v1994, %v1993
  %v2003 = vld [vmem:[%s7] sm:$0xf]
  %v2004 = vld [vmem:[%s7 + $0x4] sm:$0xf]
  %v2005 = vld [vmem:[%s7 + $0x8] sm:$0xf]
  %v2006 = vld [vmem:[%s7 + $0xc] sm:$0xf]
  %v2007 = vld [vmem:[%s7 + $0x10] sm:$0xf]
  %v2008 = vld [vmem:[%s7 + $0x14] sm:$0xf]
  %v2009 = vld [vmem:[%s7 + $0x18] sm:$0xf]
  %v2010 = vld [vmem:[%s7 + $0x1c] sm:$0xf]
  %v2011 = vld [vmem:[%s7 + $0x20] sm:$0xf]
  %v2012 = vld [vmem:[%s7 + $0x24] sm:$0xf]
  %v2013 = vld [vmem:[%s7 + $0x28] sm:$0xf]
  %v2014 = vld [vmem:[%s7 + $0x2c] sm:$0xf]
  %v2015 = vld [vmem:[%s7 + $0x30] sm:$0xf]
  %v2016 = vld [vmem:[%s7 + $0x34] sm:$0xf]
  %v2017 = vld [vmem:[%s7 + $0x38] sm:$0xf]
  %v2018 = vld [vmem:[%s7 + $0x3c] sm:$0xf]
  %v2019 = vld [vmem:[%s7 + $0x40] sm:$0xf]
  %v2020 = vld [vmem:[%s7 + $0x44] sm:$0xf]
  %v2021 = vld [vmem:[%s7 + $0x48] sm:$0xf]
  %v2022 = vld [vmem:[%s7 + $0x4c] sm:$0xf]
  %v2023 = vld [vmem:[%s7 + $0x50] sm:$0xf]
  %v2024 = vld [vmem:[%s7 + $0x54] sm:$0xf]
  %v2025 = vld [vmem:[%s7 + $0x58] sm:$0xf]
  %v2026 = vld [vmem:[%s7 + $0x5c] sm:$0xf]
  %v2027 = vld [vmem:[%s7 + $0x60] sm:$0xf]
  %v2028 = vld [vmem:[%s7 + $0x64] sm:$0xf]
  %v2029 = vld [vmem:[%s7 + $0x68] sm:$0xf]
  %v2030 = vld [vmem:[%s7 + $0x6c] sm:$0xf]
  %v2031 = vld [vmem:[%s7 + $0x70] sm:$0xf]
  %v2032 = vld [vmem:[%s7 + $0x74] sm:$0xf]
  %v2033 = vld [vmem:[%s7 + $0x78] sm:$0xf]
  %v2034 = vld [vmem:[%s7 + $0x7c] sm:$0xf]
  %v2035 = vld [vmem:[%s7 + $0x80] sm:$0xf]
  %v2036 = vld [vmem:[%s7 + $0x84] sm:$0xf]
  %v2037 = vld [vmem:[%s7 + $0x88] sm:$0xf]
  %v2038 = vld [vmem:[%s7 + $0x8c] sm:$0xf]
  %v2039 = vld [vmem:[%s7 + $0x90] sm:$0xf]
  %v2040 = vld [vmem:[%s7 + $0x94] sm:$0xf]
  %v2041 = vld [vmem:[%s7 + $0x98] sm:$0xf]
  %v2042 = vld [vmem:[%s7 + $0x9c] sm:$0xf]
  %v2043 = vld [vmem:[%s7 + $0xa0] sm:$0xf]
  %v2044 = vld [vmem:[%s7 + $0xa4] sm:$0xf]
  %v2045 = vld [vmem:[%s7 + $0xa8] sm:$0xf]
  %v2046 = vld [vmem:[%s7 + $0xac] sm:$0xf]
  %v2047 = vld [vmem:[%s7 + $0xb0] sm:$0xf]
  %v2048 = vld [vmem:[%s7 + $0xb4] sm:$0xf]
  %v2049 = vld [vmem:[%s7 + $0xb8] sm:$0xf]
  %v2050 = vld [vmem:[%s7 + $0xbc] sm:$0xf]
  %v2099 = vunpack.c.l.b16 %v2003
  %v2100 = vunpack.c.l.b16 %v2004
  %v2101 = vunpack.c.l.b16 %v2005
  %v2102 = vunpack.c.l.b16 %v2006
  %v2103 = vunpack.c.l.b16 %v2007
  %v2104 = vunpack.c.l.b16 %v2008
  %v2105 = vunpack.c.l.b16 %v2009
  %v2106 = vunpack.c.l.b16 %v2010
  %v2107 = vunpack.c.l.b16 %v2011
  %v2108 = vunpack.c.l.b16 %v2012
  %v2109 = vunpack.c.l.b16 %v2013
  %v2110 = vunpack.c.l.b16 %v2014
  %v2111 = vunpack.c.l.b16 %v2015
  %v2112 = vunpack.c.l.b16 %v2016
  %v2113 = vunpack.c.l.b16 %v2017
  %v2114 = vunpack.c.l.b16 %v2018
  %v2115 = vunpack.c.l.b16 %v2019
  %v2116 = vunpack.c.l.b16 %v2020
  %v2117 = vunpack.c.l.b16 %v2021
  %v2118 = vunpack.c.l.b16 %v2022
  %v2119 = vunpack.c.l.b16 %v2023
  %v2120 = vunpack.c.l.b16 %v2024
  %v2121 = vunpack.c.l.b16 %v2025
  %v2122 = vunpack.c.l.b16 %v2026
  %v2123 = vunpack.c.l.b16 %v2027
  %v2124 = vunpack.c.l.b16 %v2028
  %v2125 = vunpack.c.l.b16 %v2029
  %v2126 = vunpack.c.l.b16 %v2030
  %v2127 = vunpack.c.l.b16 %v2031
  %v2128 = vunpack.c.l.b16 %v2032
  %v2129 = vunpack.c.l.b16 %v2033
  %v2130 = vunpack.c.l.b16 %v2034
  %v2131 = vunpack.c.l.b16 %v2035
  %v2132 = vunpack.c.l.b16 %v2036
  %v2133 = vunpack.c.l.b16 %v2037
  %v2134 = vunpack.c.l.b16 %v2038
  %v2135 = vunpack.c.l.b16 %v2039
  %v2136 = vunpack.c.l.b16 %v2040
  %v2137 = vunpack.c.l.b16 %v2041
  %v2138 = vunpack.c.l.b16 %v2042
  %v2139 = vunpack.c.l.b16 %v2043
  %v2140 = vunpack.c.l.b16 %v2044
  %v2141 = vunpack.c.l.b16 %v2045
  %v2142 = vunpack.c.l.b16 %v2046
  %v2143 = vunpack.c.l.b16 %v2047
  %v2144 = vunpack.c.l.b16 %v2048
  %v2145 = vunpack.c.l.b16 %v2049
  %v2146 = vunpack.c.l.b16 %v2050
  %v2147 = vpack.c.b16 %v2100, %v2099
  %v2148 = vpack.c.b16 %v2102, %v2101
  %v2149 = vpack.c.b16 %v2104, %v2103
  %v2150 = vpack.c.b16 %v2106, %v2105
  %v2151 = vpack.c.b16 %v2108, %v2107
  %v2152 = vpack.c.b16 %v2110, %v2109
  %v2153 = vpack.c.b16 %v2112, %v2111
  %v2154 = vpack.c.b16 %v2114, %v2113
  %v2155 = vpack.c.b16 %v2116, %v2115
  %v2156 = vpack.c.b16 %v2118, %v2117
  %v2157 = vpack.c.b16 %v2120, %v2119
  %v2158 = vpack.c.b16 %v2122, %v2121
  %v2159 = vpack.c.b16 %v2124, %v2123
  %v2160 = vpack.c.b16 %v2126, %v2125
  %v2161 = vpack.c.b16 %v2128, %v2127
  %v2162 = vpack.c.b16 %v2130, %v2129
  %v2163 = vpack.c.b16 %v2132, %v2131
  %v2164 = vpack.c.b16 %v2134, %v2133
  %v2165 = vpack.c.b16 %v2136, %v2135
  %v2166 = vpack.c.b16 %v2138, %v2137
  %v2167 = vpack.c.b16 %v2140, %v2139
  %v2168 = vpack.c.b16 %v2142, %v2141
  %v2169 = vpack.c.b16 %v2144, %v2143
  %v2170 = vpack.c.b16 %v2146, %v2145
  %2195 = vmatpush.bf16.msra.mxu0 %v2154
  %2196 = vmatpush.bf16.msra.mxu0 %v2153
  %2197 = vmatpush.bf16.msra.mxu0 %v2152
  %2198 = vmatpush.bf16.msra.mxu0 %v2151
  %2199 = vmatpush.bf16.msra.mxu0 %v2150
  %2200 = vmatpush.bf16.msra.mxu0 %v2149
  %2201 = vmatpush.bf16.msra.mxu0 %v2148
  %2202 = vmatpush.bf16.msra.mxu0 %v2147
  %2203 = vmatmul.bf16.gmra.mxu0 %v1963
  %v2204 = vpop.f32.mrf.mxu0
  %v2205 = vadd.f32 0.0, %v2204
  %v2206 = vpop.f32.mrf.mxu0
  %v2207 = vadd.f32 0.0, %v2206
  %2208 = vmatmul.bf16.gmra.mxu0 %v1964
  %v2209 = vpop.f32.mrf.mxu0
  %v2210 = vadd.f32 0.0, %v2209
  %v2211 = vpop.f32.mrf.mxu0
  %v2212 = vadd.f32 0.0, %v2211
  %2213 = vmatmul.bf16.gmra.mxu0 %v1965
  %v2214 = vpop.f32.mrf.mxu0
  %v2215 = vadd.f32 0.0, %v2214
  %v2216 = vpop.f32.mrf.mxu0
  %v2217 = vadd.f32 0.0, %v2216
  %2218 = vmatmul.bf16.gmra.mxu0 %v1966
  %v2219 = vpop.f32.mrf.mxu0
  %v2220 = vadd.f32 0.0, %v2219
  %v2221 = vpop.f32.mrf.mxu0
  %v2222 = vadd.f32 0.0, %v2221
  %2223 = vdwg.mxu0
  %2224 = vmatpush.bf16.msra.mxu0 %v2162
  %2225 = vmatpush.bf16.msra.mxu0 %v2161
  %2226 = vmatpush.bf16.msra.mxu0 %v2160
  %2227 = vmatpush.bf16.msra.mxu0 %v2159
  %2228 = vmatpush.bf16.msra.mxu0 %v2158
  %2229 = vmatpush.bf16.msra.mxu0 %v2157
  %2230 = vmatpush.bf16.msra.mxu0 %v2156
  %2231 = vmatpush.bf16.msra.mxu0 %v2155
  %2232 = vmatmul.bf16.gmra.mxu0 %v1979
  %v2233 = vpop.f32.mrf.mxu0
  %v2234 = vadd.f32 %v2205, %v2233
  %v2235 = vpop.f32.mrf.mxu0
  %v2236 = vadd.f32 %v2207, %v2235
  %2237 = vmatmul.bf16.gmra.mxu0 %v1980
  %v2238 = vpop.f32.mrf.mxu0
  %v2239 = vadd.f32 %v2210, %v2238
  %v2240 = vpop.f32.mrf.mxu0
  %v2241 = vadd.f32 %v2212, %v2240
  %2242 = vmatmul.bf16.gmra.mxu0 %v1981
  %v2243 = vpop.f32.mrf.mxu0
  %v2244 = vadd.f32 %v2215, %v2243
  %v2245 = vpop.f32.mrf.mxu0
  %v2246 = vadd.f32 %v2217, %v2245
  %2247 = vmatmul.bf16.gmra.mxu0 %v1982
  %v2248 = vpop.f32.mrf.mxu0
  %v2249 = vadd.f32 %v2220, %v2248
  %v2250 = vpop.f32.mrf.mxu0
  %v2251 = vadd.f32 %v2222, %v2250
  %2252 = vdwg.mxu0
  %2253 = vmatpush.bf16.msra.mxu0 %v2170
  %2254 = vmatpush.bf16.msra.mxu0 %v2169
  %2255 = vmatpush.bf16.msra.mxu0 %v2168
  %2256 = vmatpush.bf16.msra.mxu0 %v2167
  %2257 = vmatpush.bf16.msra.mxu0 %v2166
  %2258 = vmatpush.bf16.msra.mxu0 %v2165
  %2259 = vmatpush.bf16.msra.mxu0 %v2164
  %2260 = vmatpush.bf16.msra.mxu0 %v2163
  %2261 = vmatmul.bf16.gmra.mxu0 %v1995
  %v2262 = vpop.f32.mrf.mxu0
  %v2263 = vadd.f32 %v2234, %v2262
  %v2264 = vpop.f32.mrf.mxu0
  %v2265 = vadd.f32 %v2236, %v2264
  %2266 = vmatmul.bf16.gmra.mxu0 %v1996
  %v2267 = vpop.f32.mrf.mxu0
  %v2268 = vadd.f32 %v2239, %v2267
  %v2269 = vpop.f32.mrf.mxu0
  %v2270 = vadd.f32 %v2241, %v2269
  %2271 = vmatmul.bf16.gmra.mxu0 %v1997
  %v2272 = vpop.f32.mrf.mxu0
  %v2273 = vadd.f32 %v2244, %v2272
  %v2274 = vpop.f32.mrf.mxu0
  %v2275 = vadd.f32 %v2246, %v2274
  %2276 = vmatmul.bf16.gmra.mxu0 %v1998
  %v2277 = vpop.f32.mrf.mxu0
  %v2278 = vadd.f32 %v2249, %v2277
  %v2279 = vpop.f32.mrf.mxu0
  %v2280 = vadd.f32 %v2251, %v2279
  %2281 = vdwg.mxu0
  %v2282 = vadd.f32 %v2263, %v2265
  %v2283 = vadd.f32 %v2282, %v2268
  %v2284 = vadd.f32 %v2283, %v2270
  %v2285 = vadd.f32 %v2284, %v2273
  %v2286 = vadd.f32 %v2285, %v2275
  %v2287 = vadd.f32 %v2286, %v2278
  %v2288 = vadd.f32 %v2287, %v2280
  %v2289 = vrot.slane %v2288, 4
  %v2290 = vadd.f32 %v2288, %v2289
  %v2291 = vrot.slane %v2290, 2
  %v2292 = vadd.f32 %v2290, %v2291
  %v2293 = vrot.slane %v2292, 1
  %v2294 = vadd.f32 %v2292, %v2293
  %v2295 = vmul.f32 %v2263, %v2263
  %v2296 = vmul.f32 %v2265, %v2265
  %v2297 = vmul.f32 %v2268, %v2268
  %v2298 = vmul.f32 %v2270, %v2270
  %v2299 = vmul.f32 %v2273, %v2273
  %v2300 = vmul.f32 %v2275, %v2275
  %v2301 = vmul.f32 %v2278, %v2278
  %v2302 = vmul.f32 %v2280, %v2280
  %v2303 = vadd.f32 %v2295, %v2296
  %v2304 = vadd.f32 %v2303, %v2297
  %v2305 = vadd.f32 %v2304, %v2298
  %v2306 = vadd.f32 %v2305, %v2299
  %v2307 = vadd.f32 %v2306, %v2300
  %v2308 = vadd.f32 %v2307, %v2301
  %v2309 = vadd.f32 %v2308, %v2302
  %v2310 = vrot.slane %v2309, 4
  %v2311 = vadd.f32 %v2309, %v2310
  %v2312 = vrot.slane %v2311, 2
  %v2313 = vadd.f32 %v2311, %v2312
  %v2314 = vrot.slane %v2313, 1
  %v2315 = vadd.f32 %v2313, %v2314
  %v2316 = vsel %vm1586, %v2294, %v2315
  %v2317 = vld [vmem:[%s12] sm:$0xff]
  %v2318 = vld [vmem:[%s12 + $0x8] sm:$0xff]
  %v2319 = vld [vmem:[%s12 + $0x10] sm:$0xff]
  %v2320 = vld [vmem:[%s12 + $0x18] sm:$0xff]
  %v2321 = vld [vmem:[%s12 + $0x20] sm:$0xff]
  %v2322 = vld [vmem:[%s12 + $0x28] sm:$0xff]
  %v2323 = vld [vmem:[%s12 + $0x30] sm:$0xff]
  %v2324 = vld [vmem:[%s12 + $0x38] sm:$0xff]
  %v2325 = vld [vmem:[%s12 + $0x40] sm:$0xff]
  %v2326 = vld [vmem:[%s12 + $0x48] sm:$0xff]
  %v2327 = vld [vmem:[%s12 + $0x50] sm:$0xff]
  %v2328 = vld [vmem:[%s12 + $0x58] sm:$0xff]
  %v2329 = vld [vmem:[%s12 + $0x60] sm:$0xff]
  %v2330 = vld [vmem:[%s12 + $0x68] sm:$0xff]
  %v2331 = vld [vmem:[%s12 + $0x70] sm:$0xff]
  %v2332 = vld [vmem:[%s12 + $0x78] sm:$0xff]
  %2333 = vmatpush.msra.mxu0 %v2332
  %2334 = vmatpush.msra.mxu0 %v2331
  %2335 = vmatpush.msra.mxu0 %v2330
  %2336 = vmatpush.msra.mxu0 %v2329
  %2337 = vmatpush.msra.mxu0 %v2328
  %2338 = vmatpush.msra.mxu0 %v2327
  %2339 = vmatpush.msra.mxu0 %v2326
  %2340 = vmatpush.msra.mxu0 %v2325
  %2341 = vmatpush.msra.mxu0 %v2324
  %2342 = vmatpush.msra.mxu0 %v2323
  %2343 = vmatpush.msra.mxu0 %v2322
  %2344 = vmatpush.msra.mxu0 %v2321
  %2345 = vmatpush.msra.mxu0 %v2320
  %2346 = vmatpush.msra.mxu0 %v2319
  %2347 = vmatpush.msra.mxu0 %v2318
  %2348 = vmatpush.msra.mxu0 %v2317
  %2349 = vmatmul.f32.gmra.mxu0 %v2316
  %v2350 = vpop.f32.mrf.mxu0
  %v2351 = vadd.f32 0.0, %v2350
  %2352 = vdwg.mxu0
  %v2353 = vmul.f32 %v2351, 0.00048828125
  %v2354 = vmul.f32 %v2353, %v2353
  %v2356 = vrot.slane %v2354, 7
  %v2358 = vsub.f32 %v2353, %v2356
  %v2359 = vmax.f32 %v2358, 0.0
  %v2360 = vld [vmem:[%s10] sm:$0x1]
  %v2361 = vadd.f32 %v2359, 1e-05
  %v2362 = vrsqrt.pop %v2361
  %v2363 = vmul.f32 %v2362, %v2361
  %v2364 = vmul.f32 %v2363, %v2362
  %v2365 = vmul.f32 0.5, %v2364
  %v2366 = vsub.f32 1.5, %v2365
  %v2367 = vmul.f32 %v2362, %v2366
  %vm2368 = vweird.f32 %v2361
  %vm2369 = vweird.f32 %v2362
  %vm2370 = vmor %vm2368, %vm2369
  %v2371 = vsel %vm2370, %v2362, %v2367
  %2373 = vst [vmem:[#allocation1] sm:$0xff] %v2371
  %s2374 = scalar_lea.vmem [#allocation1], 1
  %v2375 = vld [vmem:[%s2374] ss:$9 sm:$0xff]
  %v2377 = vmul.f32 %v2360, %v2375
  %v2378 = vld [vmem:[%s11] sm:$0x1]
  %v2379 = vmul.f32 %v2353, %v2377
  %v2380 = vsub.f32 %v2378, %v2379
  %v2382 = vperm.slane %v2380, 0
  %v2384 = vsel %vm1586, %v2377, %v2382
  %v2385 = vld [vmem:[%s13] sm:$0xf]
  %v2387 = vsel %vm1657, %v2384, 0
  %v2390 = vsel %vm1661, %v2385, 0
  %2392 = vmatpush.msra.mxu0 0.0
  %2393 = vmatpush.msra.mxu0 0.0
  %2394 = vmatpush.msra.mxu0 0.0
  %2395 = vmatpush.msra.mxu0 0.0
  %2396 = vmatpush.msra.mxu0 0.0
  %2397 = vmatpush.msra.mxu0 0.0
  %2398 = vmatpush.msra.mxu0 0.0
  %2399 = vmatpush.msra.mxu0 0.0
  %2400 = vmatpush.msra.mxu0 0.0
  %2401 = vmatpush.msra.mxu0 0.0
  %2402 = vmatpush.msra.mxu0 0.0
  %2403 = vmatpush.msra.mxu0 0.0
  %2404 = vmatpush.msra.mxu0 0.0
  %2405 = vmatpush.msra.mxu0 0.0
  %2406 = vmatpush.msra.mxu0 0.0
  %2407 = vmatpush.msra.mxu0 %v2390
  %2408 = vmatmul.f32.gmra.mxu0 %v2387
  %v2409 = vpop.f32.mrf.mxu0
  %v2410 = vadd.f32 0.0, %v2409
  %2411 = vdwg.mxu0
  %v2412 = vperm.slane %v2410, 0
  %v2413 = vmul.f32 %v2263, %v2412
  %v2414 = vmul.f32 %v2265, %v2412
  %v2415 = vmul.f32 %v2268, %v2412
  %v2416 = vmul.f32 %v2270, %v2412
  %v2417 = vmul.f32 %v2273, %v2412
  %v2418 = vmul.f32 %v2275, %v2412
  %v2419 = vmul.f32 %v2278, %v2412
  %v2420 = vmul.f32 %v2280, %v2412
  %v2421 = vperm.slane %v2410, 1
  %v2422 = vadd.f32 %v2413, %v2421
  %v2423 = vadd.f32 %v2414, %v2421
  %v2424 = vadd.f32 %v2415, %v2421
  %v2425 = vadd.f32 %v2416, %v2421
  %v2426 = vadd.f32 %v2417, %v2421
  %v2427 = vadd.f32 %v2418, %v2421
  %v2428 = vadd.f32 %v2419, %v2421
  %v2429 = vadd.f32 %v2420, %v2421
  %v2430 = vmax.f32 %v2422, 0.0
  %v2431 = vmax.f32 %v2423, 0.0
  %v2432 = vmax.f32 %v2424, 0.0
  %v2433 = vmax.f32 %v2425, 0.0
  %v2434 = vmax.f32 %v2426, 0.0
  %v2435 = vmax.f32 %v2427, 0.0
  %v2436 = vmax.f32 %v2428, 0.0
  %v2437 = vmax.f32 %v2429, 0.0
  %2438 = vst [vmem:[%s14] sm:$0xff] %v2430
  %2439 = vst [vmem:[%s14 + $0x8] sm:$0xff] %v2431
  %2440 = vst [vmem:[%s14 + $0x10] sm:$0xff] %v2432
  %2441 = vst [vmem:[%s14 + $0x18] sm:$0xff] %v2433
  %2442 = vst [vmem:[%s14 + $0x20] sm:$0xff] %v2434
  %2443 = vst [vmem:[%s14 + $0x28] sm:$0xff] %v2435
  %2444 = vst [vmem:[%s14 + $0x30] sm:$0xff] %v2436
  %2445 = vst [vmem:[%s14 + $0x38] sm:$0xff] %v2437
  // Predicated region
  $region58: #{upsampler_forward.1} parent=0 // pred_check
    _
  $region59: #{upsampler_forward.1} parent=0 // pred_check_branch
    %2447 = sbr.rel (0) target = $region61
  $region60: #{upsampler_forward.1} parent=0 // pred_region
    _
  $region61: #{upsampler_forward.1} parent=0 // pred_fallthru
    _
  // Predicated region
  $region62: #{upsampler_forward.1} parent=0 // pred_check
    _
  $region63: #{upsampler_forward.1} parent=0 // pred_check_branch
    %2449 = sbr.rel (0) target = $region65
  $region64: #{upsampler_forward.1} parent=0 // pred_region
    _
  $region65: #{upsampler_forward.1} parent=0 // pred_fallthru
    _

</llo_original>
